<compile_context>
chip_gen: v5e
topology: v5e:2x2
jax: 0.10.0
libtpu: 0.0.40
codegen_flags: <defaults>
</compile_context>

<pallas_src>
import functools
import math

import jax
import jax.numpy as jnp
from jax.experimental import pallas as pl
from jax.experimental.pallas import tpu as pltpu

LN_EPS = 0.01
NEG_INF = -1e10


# ---------------- small helpers ----------------

def _layernorm_2d(x, gamma, beta, eps):
    mean = jnp.mean(x, axis=-1, keepdims=True)
    var = jnp.mean((x - mean) ** 2, axis=-1, keepdims=True)
    return (x - mean) * jax.lax.rsqrt(var + eps) * gamma + beta


def _pick_tile(n, target, mult):
    """Largest tile <= target that divides n and is a multiple of `mult`; fallback: n."""
    if n <= target:
        return n
    t = (target // mult) * mult
    while t >= mult:
        if n % t == 0:
            return t
        t -= mult
    return n


def _vmem_limit_bytes():
    # ~100 MiB on v5e/v6e (128 MiB physical), ~51 MiB on v7x (64 MiB physical).
    try:
        cap = pltpu.get_tpu_info().vmem_capacity_bytes
    except Exception:
        cap = 128 * 1024 * 1024
    return int(min(cap * 4 // 5, 100 * 1024 * 1024))


def _params(parallel_axes, arbitrary_axes):
    sem = ("parallel",) * parallel_axes + ("arbitrary",) * arbitrary_axes
    return pltpu.CompilerParams(dimension_semantics=sem,
                                vmem_limit_bytes=_vmem_limit_bytes())


def _invariant_spec(shape, index_map):
    # Block indexed at (0,0) on every grid step -> single-buffer it instead of the
    # default double buffering (halves its VMEM footprint for zero cost).
    return pl.BlockSpec(shape, index_map, pipeline_mode=pl.Buffered(1))


# ---------------- Pallas kernels ----------------

def _ln_qkv_kernel(x_ref, g1_ref, b1_ref, wq_ref, wk_ref, wv_ref,
                   x1_ref, q_ref, k_ref, v_ref):
    """Row tile: LayerNorm1 (computed once, at n==0) + column-tiled Q/K/V projections.

    The (D, D) projection weights are streamed in (D, tn) column blocks along the
    'arbitrary' grid axis, so no full weight matrix has to stay VMEM-resident."""
    n = pl.program_id(1)

    @pl.when(n == 0)
    def _():
        x1 = _layernorm_2d(x_ref[...], g1_ref[...], b1_ref[...], LN_EPS)
        x1_ref[...] = x1.astype(x1_ref.dtype)          # bf16, resident across the n axis

    x1b = x1_ref[...]                                   # reuse hoisted LN result
    q_ref[...] = jnp.dot(x1b, wq_ref[...],
                         preferred_element_type=jnp.float32).astype(q_ref.dtype)
    k_ref[...] = jnp.dot(x1b, wk_ref[...],
                         preferred_element_type=jnp.float32).astype(k_ref.dtype)
    v_ref[...] = jnp.dot(x1b, wv_ref[...],
                         preferred_element_type=jnp.float32).astype(v_ref.dtype)


def _flash_attn_kernel(q_ref, k_ref, v_ref, o_ref, m_sc, l_sc, acc_sc, *,
                       n_heads, head_dim):
    """Per (batch, q tile): online-softmax (flash) attention over streamed K/V blocks.

    Only (tq, tkv) scores per head exist at any time; running (m, l) and the (tq, D)
    f32 accumulator live in VMEM scratch across the 'arbitrary' kv axis.  The head
    output is written with ONE lane-dense full-width store at the last kv step."""
    qi = pl.program_id(1)
    kv = pl.program_id(2)
    n_kv = pl.num_programs(2)
    tq = q_ref.shape[1]
    tkv = k_ref.shape[1]

    @pl.when(kv == 0)
    def _():
        m_sc[...] = jnp.full(m_sc.shape, -jnp.inf, m_sc.dtype)
        l_sc[...] = jnp.zeros(l_sc.shape, l_sc.dtype)
        acc_sc[...] = jnp.zeros(acc_sc.shape, acc_sc.dtype)

    # Skip K/V blocks that lie entirely above the causal diagonal for this q tile.
    @pl.when(kv * tkv <= qi * tq + (tq - 1))
    def _():
        # causal mask generated in-kernel (no HBM mask buffer / DMA), kept f32.
        row = jax.lax.broadcasted_iota(jnp.int32, (tq, tkv), 0) + qi * tq
        col = jax.lax.broadcasted_iota(jnp.int32, (tq, tkv), 1) + kv * tkv
        neg = jnp.where(col <= row, 0.0, NEG_INF).astype(jnp.float32)

        q_all = q_ref[0]                                # (tq, D)  bf16
        k_all = k_ref[0]                                # (tkv, D) bf16
        v_all = v_ref[0]

        # TODO(synk): for many-head configs switch this static unroll to a lax.fori_loop
        # (or a head grid axis) to bound live ranges; with kv tiling each head only holds
        # a (tq, tkv) score block so the unroll is cheap at these head counts.
        for n in range(n_heads):
            lo = n * head_dim
            q = q_all[:, lo:lo + head_dim]
            k = k_all[:, lo:lo + head_dim]
            v = v_all[:, lo:lo + head_dim]
            # 1/sqrt(head_dim) already folded into W_q at init.
            s = jax.lax.dot_general(q, k, (((1,), (1,)), ((), ())),
                                    preferred_element_type=jnp.float32) + neg
            m_prev = m_sc[:, n:n + 1]
            m_new = jnp.maximum(m_prev, jnp.max(s, axis=-1, keepdims=True))
            alpha = jnp.exp(m_prev - m_new)
            p = jnp.exp(s - m_new)
            l_sc[:, n:n + 1] = alpha * l_sc[:, n:n + 1] + jnp.sum(p, axis=-1, keepdims=True)
            acc_sc[:, lo:lo + head_dim] = (
                alpha * acc_sc[:, lo:lo + head_dim]
                + jnp.dot(p.astype(jnp.bfloat16), v, preferred_element_type=jnp.float32))
            m_sc[:, n:n + 1] = m_new

    @pl.when(kv == n_kv - 1)
    def _():
        for n in range(n_heads):
            lo = n * head_dim
            acc_sc[:, lo:lo + head_dim] *= pl.reciprocal(l_sc[:, n:n + 1], approx=True)
        # one lane-dense (tq, D) store instead of n_heads masked partial-width stores.
        o_ref[0] = acc_sc[...].astype(o_ref.dtype)


def _mlp_kernel(x1_ref, attn_ref, wsum_ref, g2_ref, b2_ref,
                w1_ref, bfc1_ref, w2_ref, bfc2_ref, out_ref, x2_sc):
    """Row tile x F tile: W_out channel-scale + residual + LN2 + MLP + residual.

    The (D, F)/(F, D) MLP weights are streamed in tf-wide blocks along the 'arbitrary'
    F axis; the second matmul accumulates into the resident f32 output block, which is
    initialised with the x2 residual at f==0 (so the skip connection is free)."""
    f = pl.program_id(1)

    @pl.when(f == 0)
    def _():
        x = (x1_ref[...].astype(jnp.float32)
             + attn_ref[...].astype(jnp.float32) * wsum_ref[...])
        x2 = _layernorm_2d(x, g2_ref[...], b2_ref[...], LN_EPS)
        x2_sc[...] = x2.astype(jnp.bfloat16)            # hoisted matmul operand
        out_ref[...] = x2                               # residual term of the second skip

    h = jnp.dot(x2_sc[...], w1_ref[...],
                preferred_element_type=jnp.float32) + bfc1_ref[...]
    h = jnp.maximum(h, 0.0)
    out_ref[...] += jnp.dot(h.astype(jnp.bfloat16), w2_ref[...],
                            preferred_element_type=jnp.float32)

    @pl.when(f == pl.num_programs(1) - 1)
    def _():
        out_ref[...] += bfc2_ref[...]


def _unembed_kernel(x_ref, g_ref, b_ref, wue_ref, out_ref, x2_sc):
    """Final LayerNorm hoisted out of the vocab-tiled grid (computed once per row tile
    at v==0 into a bf16 VMEM scratch) + vocab-tiled unembedding matmul."""
    @pl.when(pl.program_id(1) == 0)
    def _():
        x2 = _layernorm_2d(x_ref[...], g_ref[...], b_ref[...], LN_EPS)
        x2_sc[...] = x2.astype(jnp.bfloat16)

    out_ref[...] = jnp.dot(x2_sc[...], wue_ref[...],
                           preferred_element_type=jnp.float32)


# ---------------- wrappers ----------------

def _transformer_block(x, layer, n_heads, head_dim):
    B, S, D = x.shape
    F = layer['w1_bf16'].shape[1]
    R = B * S

    # ---- LayerNorm1 + Q/K/V projections (row-tiled, weight column-tiled) ----
    # row tile target 512 (mem-bound sweet spot on v5e/v6e); re-derive smaller on v7x.
    tr = _pick_tile(R, 512, 8)
    tn = _pick_tile(D, 512, 128)
    x1, q, k, v = pl.pallas_call(
        _ln_qkv_kernel,
        out_shape=(jax.ShapeDtypeStruct((R, D), jnp.bfloat16),
                   jax.ShapeDtypeStruct((R, D), jnp.bfloat16),
                   jax.ShapeDtypeStruct((R, D), jnp.bfloat16),
                   jax.ShapeDtypeStruct((R, D), jnp.bfloat16)),
        grid=(R // tr, D // tn),
        in_specs=[pl.BlockSpec((tr, D), lambda r, n: (r, 0)),
                  _invariant_spec((1, D), lambda r, n: (0, 0)),
                  _invariant_spec((1, D), lambda r, n: (0, 0)),
                  pl.BlockSpec((D, tn), lambda r, n: (0, n)),
                  pl.BlockSpec((D, tn), lambda r, n: (0, n)),
                  pl.BlockSpec((D, tn), lambda r, n: (0, n))],
        out_specs=(pl.BlockSpec((tr, D), lambda r, n: (r, 0)),
                   pl.BlockSpec((tr, tn), lambda r, n: (r, n)),
                   pl.BlockSpec((tr, tn), lambda r, n: (r, n)),
                   pl.BlockSpec((tr, tn), lambda r, n: (r, n))),
        compiler_params=_params(1, 1),
    )(x.reshape(R, D), layer['g1'], layer['b1'],
      layer['Wq_bf16'], layer['Wk_bf16'], layer['Wv_bf16'])

    # ---- flash attention: q tiled, K/V streamed in tkv blocks, online softmax ----
    q3 = q.reshape(B, S, D)
    k3 = k.reshape(B, S, D)
    v3 = v.reshape(B, S, D)
    tq = _pick_tile(S, 512, 8)
    tkv = _pick_tile(S, 512, 8)
    heads = pl.pallas_call(
        functools.partial(_flash_attn_kernel, n_heads=n_heads, head_dim=head_dim),
        out_shape=jax.ShapeDtypeStruct((B, S, D), jnp.bfloat16),
        grid=(B, S // tq, S // tkv),
        in_specs=[pl.BlockSpec((1, tq, D), lambda b, qi, kv: (b, qi, 0)),
                  pl.BlockSpec((1, tkv, D), lambda b, qi, kv: (b, kv, 0)),
                  pl.BlockSpec((1, tkv, D), lambda b, qi, kv: (b, kv, 0))],
        out_specs=pl.BlockSpec((1, tq, D), lambda b, qi, kv: (b, qi, 0)),
        scratch_shapes=[pltpu.VMEM((tq, n_heads), jnp.float32),   # running max  m
                        pltpu.VMEM((tq, n_heads), jnp.float32),   # running sum  l
                        pltpu.VMEM((tq, D), jnp.float32)],        # f32 accumulator
        compiler_params=_params(2, 1),
    )(q3, k3, v3)

    # ---- head-scramble glue (reference's reshape(b,-1,q) index pattern), bf16 ----
    # TODO(synk): fuse this pure permutation into the attention epilogue once Mosaic
    # reshape-transpose of (S, head_dim) tiles is validated; kept in XLA for robustness,
    # at half the previous HBM cost since `heads` is stored bf16.
    heads_bnsh = jnp.transpose(heads.reshape(B, S, n_heads, head_dim), (0, 2, 1, 3))
    attn_pre = jnp.swapaxes(heads_bnsh.reshape(B, n_heads * head_dim, S), 1, 2)

    # ---- W_out channel-scale + residual + LN2 + MLP (F-tiled) + residual ----
    tf = _pick_tile(F, 512, 128)
    out = pl.pallas_call(
        _mlp_kernel,
        out_shape=jax.ShapeDtypeStruct((R, D), jnp.float32),
        grid=(R // tr, F // tf),
        in_specs=[pl.BlockSpec((tr, D), lambda r, f: (r, 0)),
                  pl.BlockSpec((tr, D), lambda r, f: (r, 0)),
                  _invariant_spec((1, D), lambda r, f: (0, 0)),
                  _invariant_spec((1, D), lambda r, f: (0, 0)),
                  _invariant_spec((1, D), lambda r, f: (0, 0)),
                  pl.BlockSpec((D, tf), lambda r, f: (0, f)),
                  pl.BlockSpec((1, tf), lambda r, f: (0, f)),
                  pl.BlockSpec((tf, D), lambda r, f: (f, 0)),
                  _invariant_spec((1, D), lambda r, f: (0, 0))],
        out_specs=pl.BlockSpec((tr, D), lambda r, f: (r, 0)),
        scratch_shapes=[pltpu.VMEM((tr, D), jnp.bfloat16)],
        compiler_params=_params(1, 1),
    )(x1, attn_pre.reshape(R, D), layer['w_sum'], layer['g2'], layer['b2'],
      layer['w1_bf16'], layer['bfc1'], layer['w2_bf16'], layer['bfc2'])
    return out.reshape(B, S, D)


def transformer_forward(tokens, params, *, n_heads, last_token=True):
    D = params['W_embed_T'].shape[1]
    head_dim = D // n_heads
    B, S = tokens.shape

    # token-embedding gather + positional add kept in XLA (row gather; lane-dense D
    # because W_embed is stored transposed at init).
    x = params['W_embed_T'][tokens] + params['W_pos'][:S]

    for layer in params['layers']:
        x = _transformer_block(x, layer, n_heads, head_dim)

    # slice to the last token BEFORE the unembedding matmul (S-fold FLOP/HBM cut).
    if last_token:
        x2d = x[:, -1, :]
    else:
        x2d = x.reshape(B * S, D)
    R = x2d.shape[0]
    V = params['W_ue_bf16'].shape[1]

    tr = _pick_tile(R, 512, 8)
    # bigger vocab tiles -> fewer serial grid steps / wider MXU N; ~2k on v5e/v6e,
    # cap lower on v7x where the double-buffered (D, tv) bf16 tile must fit 64 MiB.
    tv = _pick_tile(V, 2048, 128)
    logits = pl.pallas_call(
        _unembed_kernel,
        out_shape=jax.ShapeDtypeStruct((R, V), jnp.float32),
        grid=(R // tr, V // tv),
        in_specs=[pl.BlockSpec((tr, D), lambda r, v: (r, 0)),
                  _invariant_spec((1, D), lambda r, v: (0, 0)),
                  _invariant_spec((1, D), lambda r, v: (0, 0)),
                  pl.BlockSpec((D, tv), lambda r, v: (0, v))],
        out_specs=pl.BlockSpec((tr, tv), lambda r, v: (r, v)),
        scratch_shapes=[pltpu.VMEM((tr, D), jnp.bfloat16)],
        # vocab axis is 'arbitrary' so the hoisted-LN scratch carries across it.
        compiler_params=_params(1, 1),
    )(x2d, params['g_f'], params['b_f'], params['W_ue_bf16'])

    if last_token:
        return logits                      # (B, V)
    return logits.reshape(B, S, V)


# ---------------- deterministic parameter init ----------------

def init_params(key, *, d_model, n_vocab, max_seq_len, n_heads, n_layers, d_mlp,
                init_scale=1.0):
    H = d_model // n_heads
    keys = jax.random.split(key, 4 + n_layers)
    scale = init_scale / math.sqrt(d_model)

    W_embed = jax.random.normal(keys[0], (d_model, n_vocab), jnp.float32) * scale
    W_ue = jax.random.normal(keys[2], (d_model, n_vocab), jnp.float32) * scale
    params = {
        'W_embed': W_embed,                        # (D, V) f32, reference layout
        'W_embed_T': jnp.transpose(W_embed),       # (V, D) for lane-dense row gather
        'W_pos': jax.random.normal(keys[1], (max_seq_len, d_model), jnp.float32) * scale,
        'W_ue': W_ue,
        'W_ue_bf16': W_ue.astype(jnp.bfloat16),
        'g_f': jnp.ones((1, d_model), jnp.float32),
        'b_f': jnp.zeros((1, d_model), jnp.float32),
        'layers': [],
    }
    for i in range(n_layers):
        lk = jax.random.split(keys[4 + i], 6)
        W_qkv = jax.random.normal(lk[0], (n_heads, d_model, 3 * H), jnp.float32) * scale
        W_out = jax.random.normal(lk[1], (n_heads, H, d_model), jnp.float32) * scale
        w1 = jax.random.normal(lk[2], (d_model, d_mlp), jnp.float32) / math.sqrt(d_model)
        w2 = jax.random.normal(lk[4], (d_mlp, d_model), jnp.float32) / math.sqrt(d_mlp)

        # head-major column layout; softmax scale folded into the Q projection weights.
        wq = jnp.transpose(W_qkv[:, :, 0:H], (1, 0, 2)).reshape(d_model, d_model)
        wk = jnp.transpose(W_qkv[:, :, H:2 * H], (1, 0, 2)).reshape(d_model, d_model)
        wv = jnp.transpose(W_qkv[:, :, 2 * H:3 * H], (1, 0, 2)).reshape(d_model, d_model)

        params['layers'].append({
            # reference (f32) weights
            'W_qkv': W_qkv, 'W_out': W_out, 'w1': w1, 'w2': w2,
            # kernel weights
            'Wq_bf16': (wq * (1.0 / math.sqrt(H))).astype(jnp.bfloat16),
            'Wk_bf16': wk.astype(jnp.bfloat16),
            'Wv_bf16': wv.astype(jnp.bfloat16),
            'w_sum': jnp.sum(W_out, axis=(0, 1)).reshape(1, d_model),
            'w1_bf16': w1.astype(jnp.bfloat16),
            'w2_bf16': w2.astype(jnp.bfloat16),
            'g1': jnp.ones((1, d_model), jnp.float32),
            'b1': jnp.zeros((1, d_model), jnp.float32),
            'g2': jnp.ones((1, d_model), jnp.float32),
            'b2': jnp.zeros((1, d_model), jnp.float32),
            'bfc1': jax.random.normal(lk[3], (1, d_mlp), jnp.float32) * 0.1,
            'bfc2': jax.random.normal(lk[5], (1, d_model), jnp.float32) * 0.1,
        })
    return params


# ---------------- pure-JAX (f32) reference mirroring the PyTorch module ----------------

def reference_forward(tokens, params, *, n_heads, last_token=True):
    D = params['W_embed'].shape[0]
    head_dim = D // n_heads
    B, S = tokens.shape

    def ln(x, g, b):
        m = jnp.mean(x, -1, keepdims=True)
        v = jnp.mean((x - m) ** 2, -1, keepdims=True)
        return (x - m) / jnp.sqrt(v + LN_EPS) * g + b

    x = jnp.transpose(params['W_embed'][:, tokens], (1, 2, 0))
    x = x + params['W_pos'][:S]
    mask = NEG_INF * (1.0 - jnp.tril(jnp.ones((S, S), jnp.float32)))
    for layer in params['layers']:
        x = ln(x, layer['g1'], layer['b1'])
        qkv = jnp.einsum('bsd,ndh->bnsh', x, layer['W_qkv'])
        q, k, v = jnp.split(qkv, 3, axis=-1)
        attn = jnp.einsum('bnqh,bnkh->bnqk', q, k) / math.sqrt(head_dim)
        attn = attn + mask
        attn = jax.nn.softmax(attn, axis=-1)
        out = jnp.einsum('bnqk,bnkh->bnqh', attn, v)
        out = out.reshape(out.shape[0], -1, out.shape[-2])
        x = x + jnp.einsum('bds,nhd->bsd', out, layer['W_out'])
        x = ln(x, layer['g2'], layer['b2'])
        h = jnp.maximum(x @ layer['w1'] + layer['bfc1'], 0.0)
        x = x + (h @ layer['w2'] + layer['bfc2'])
    x = ln(x, params['g_f'], params['b_f'])
    x = x @ params['W_ue']
    if last_token:
        x = x[..., -1, :]
    return x


if __name__ == "__main__":
    d_model, n_vocab, max_seq_len = 32, 16, 8
    n_heads, n_layers, d_mlp = 2, 2, 64
    B, S = 2, 8

    key = jax.random.PRNGKey(0)
    k_param, k_tok = jax.random.split(key)
    params = init_params(k_param, d_model=d_model, n_vocab=n_vocab,
                         max_seq_len=max_seq_len, n_heads=n_heads,
                         n_layers=n_layers, d_mlp=d_mlp, init_scale=1.0)
    tokens = jax.random.randint(k_tok, (B, S), 0, n_vocab, dtype=jnp.int32)

    fwd = jax.jit(functools.partial(transformer_forward, n_heads=n_heads,
                                    last_token=True))
    out = fwd(tokens, params)
    out = jax.block_until_ready(out)

    ref = reference_forward(tokens, params, n_heads=n_heads, last_token=True)
    assert out.shape == (B, n_vocab)
    # bf16 matmul operands + bf16 inter-kernel activations + approx softmax reciprocal
    # vs. the pure-f32 reference -> looser tolerance.
    assert jnp.allclose(out, ref, atol=5e-2, rtol=5e-2), "Pallas output mismatch vs reference"
    print("KERNEL_OK")
</pallas_src>

<mosaic_0001>
module attributes {stable_mosaic.version = 11 : i64} {
  func.func @_ln_qkv_kernel(%arg0: i32, %arg1: i32, %arg2: memref<16x32xf32, #tpu.memory_space<vmem>>, %arg3: memref<1x32xf32, #tpu.memory_space<vmem>>, %arg4: memref<1x32xf32, #tpu.memory_space<vmem>>, %arg5: memref<32x32xbf16, #tpu.memory_space<vmem>>, %arg6: memref<32x32xbf16, #tpu.memory_space<vmem>>, %arg7: memref<32x32xbf16, #tpu.memory_space<vmem>>, %arg8: memref<16x32xbf16, #tpu.memory_space<vmem>>, %arg9: memref<16x32xbf16, #tpu.memory_space<vmem>>, %arg10: memref<16x32xbf16, #tpu.memory_space<vmem>>, %arg11: memref<16x32xbf16, #tpu.memory_space<vmem>>) attributes {dimension_semantics = [#tpu.dimension_semantics<parallel>, #tpu.dimension_semantics<arbitrary>], iteration_bounds = array<i64: 1, 1>, scalar_prefetch = 0 : i64, scratch_operands = 0 : i64, tpu.core_type = #tpu.core_type<tc>, window_params = [{transform_indices = @transform_0, window_bounds = array<i64: 16, 32>}, {pipeline_mode = #tpu.pipeline_mode<synchronous>, transform_indices = @transform_1, window_bounds = array<i64: 1, 32>}, {pipeline_mode = #tpu.pipeline_mode<synchronous>, transform_indices = @transform_2, window_bounds = array<i64: 1, 32>}, {transform_indices = @transform_3, window_bounds = array<i64: 32, 32>}, {transform_indices = @transform_4, window_bounds = array<i64: 32, 32>}, {transform_indices = @transform_5, window_bounds = array<i64: 32, 32>}, {transform_indices = @transform_6, window_bounds = array<i64: 16, 32>}, {transform_indices = @transform_7, window_bounds = array<i64: 16, 32>}, {transform_indices = @transform_8, window_bounds = array<i64: 16, 32>}, {transform_indices = @transform_9, window_bounds = array<i64: 16, 32>}]} {
    %c0_i32 = arith.constant 0 : i32
    %0 = arith.cmpi eq, %arg1, %c0_i32 : i32
    %1 = arith.extui %0 : i1 to i32
    %c0_i32_0 = arith.constant 0 : i32
    %2 = arith.cmpi ne, %1, %c0_i32_0 : i32
    scf.if %2 {
      %c0_16 = arith.constant 0 : index
      %c0_17 = arith.constant 0 : index
      %16 = vector.load %arg2[%c0_16, %c0_17] : memref<16x32xf32, #tpu.memory_space<vmem>>, vector<16x32xf32>
      %c0_18 = arith.constant 0 : index
      %c0_19 = arith.constant 0 : index
      %17 = vector.load %arg3[%c0_18, %c0_19] : memref<1x32xf32, #tpu.memory_space<vmem>>, vector<1x32xf32>
      %c0_20 = arith.constant 0 : index
      %c0_21 = arith.constant 0 : index
      %18 = vector.load %arg4[%c0_20, %c0_21] : memref<1x32xf32, #tpu.memory_space<vmem>>, vector<1x32xf32>
      %cst_22 = arith.constant dense<0.000000e+00> : vector<16xf32>
      %19 = vector.multi_reduction <add>, %16, %cst_22 [1] : vector<16x32xf32> to vector<16xf32>
      %20 = vector.shape_cast %19 : vector<16xf32> to vector<16x1xf32>
      %cst_23 = arith.constant 3.200000e+01 : f32
      %21 = vector.broadcast %cst_23 : f32 to vector<16x1xf32>
      %22 = arith.divf %20, %21 : vector<16x1xf32>
      %23 = vector.broadcast %22 : vector<16x1xf32> to vector<16x32xf32>
      %24 = arith.subf %16, %23 : vector<16x32xf32>
      %25 = arith.mulf %24, %24 : vector<16x32xf32>
      %cst_24 = arith.constant dense<0.000000e+00> : vector<16xf32>
      %26 = vector.multi_reduction <add>, %25, %cst_24 [1] : vector<16x32xf32> to vector<16xf32>
      %27 = vector.shape_cast %26 : vector<16xf32> to vector<16x1xf32>
      %cst_25 = arith.constant 3.200000e+01 : f32
      %28 = vector.broadcast %cst_25 : f32 to vector<16x1xf32>
      %29 = arith.divf %27, %28 : vector<16x1xf32>
      %30 = vector.broadcast %22 : vector<16x1xf32> to vector<16x32xf32>
      %31 = arith.subf %16, %30 : vector<16x32xf32>
      %cst_26 = arith.constant 0.00999999977 : f32
      %32 = vector.broadcast %cst_26 : f32 to vector<16x1xf32>
      %33 = arith.addf %29, %32 : vector<16x1xf32>
      %34 = math.rsqrt %33 : vector<16x1xf32>
      %35 = vector.broadcast %34 : vector<16x1xf32> to vector<16x32xf32>
      %36 = arith.mulf %31, %35 : vector<16x32xf32>
      %37 = vector.broadcast %17 : vector<1x32xf32> to vector<16x32xf32>
      %38 = arith.mulf %36, %37 : vector<16x32xf32>
      %39 = vector.broadcast %18 : vector<1x32xf32> to vector<16x32xf32>
      %40 = arith.addf %38, %39 : vector<16x32xf32>
      %41 = arith.truncf %40 : vector<16x32xf32> to vector<16x32xbf16>
      %c0_27 = arith.constant 0 : index
      %c0_28 = arith.constant 0 : index
      %42 = vector.load %arg8[%c0_27, %c0_28] : memref<16x32xbf16, #tpu.memory_space<vmem>>, vector<16x32xbf16>
      tpu.vector_store %arg8[%c0_27, %c0_28], %41 {strides = array<i32>} : memref<16x32xbf16, #tpu.memory_space<vmem>>, vector<16x32xbf16>,
    } else {
    }
    %c0 = arith.constant 0 : index
    %c0_1 = arith.constant 0 : index
    %3 = vector.load %arg8[%c0, %c0_1] : memref<16x32xbf16, #tpu.memory_space<vmem>>, vector<16x32xbf16>
    %c0_2 = arith.constant 0 : index
    %c0_3 = arith.constant 0 : index
    %4 = vector.load %arg5[%c0_2, %c0_3] : memref<32x32xbf16, #tpu.memory_space<vmem>>, vector<32x32xbf16>
    %cst = arith.constant dense<0.000000e+00> : vector<16x32xf32>
    %5 = tpu.matmul %3, %4, %cst {dimension_numbers = #tpu.dot_dimension_numbers<[1], [0], [0], [1], [0, 0, 1, 1], [], []>} : vector<16x32xbf16>, vector<32x32xbf16>, vector<16x32xf32> -> vector<16x32xf32>
    %6 = arith.truncf %5 : vector<16x32xf32> to vector<16x32xbf16>
    %c0_4 = arith.constant 0 : index
    %c0_5 = arith.constant 0 : index
    %7 = vector.load %arg9[%c0_4, %c0_5] : memref<16x32xbf16, #tpu.memory_space<vmem>>, vector<16x32xbf16>
    tpu.vector_store %arg9[%c0_4, %c0_5], %6 {strides = array<i32>} : memref<16x32xbf16, #tpu.memory_space<vmem>>, vector<16x32xbf16>,
    %c0_6 = arith.constant 0 : index
    %c0_7 = arith.constant 0 : index
    %8 = vector.load %arg6[%c0_6, %c0_7] : memref<32x32xbf16, #tpu.memory_space<vmem>>, vector<32x32xbf16>
    %cst_8 = arith.constant dense<0.000000e+00> : vector<16x32xf32>
    %9 = tpu.matmul %3, %8, %cst_8 {dimension_numbers = #tpu.dot_dimension_numbers<[1], [0], [0], [1], [0, 0, 1, 1], [], []>} : vector<16x32xbf16>, vector<32x32xbf16>, vector<16x32xf32> -> vector<16x32xf32>
    %10 = arith.truncf %9 : vector<16x32xf32> to vector<16x32xbf16>
    %c0_9 = arith.constant 0 : index
    %c0_10 = arith.constant 0 : index
    %11 = vector.load %arg10[%c0_9, %c0_10] : memref<16x32xbf16, #tpu.memory_space<vmem>>, vector<16x32xbf16>
    tpu.vector_store %arg10[%c0_9, %c0_10], %10 {strides = array<i32>} : memref<16x32xbf16, #tpu.memory_space<vmem>>, vector<16x32xbf16>,
    %c0_11 = arith.constant 0 : index
    %c0_12 = arith.constant 0 : index
    %12 = vector.load %arg7[%c0_11, %c0_12] : memref<32x32xbf16, #tpu.memory_space<vmem>>, vector<32x32xbf16>
    %cst_13 = arith.constant dense<0.000000e+00> : vector<16x32xf32>
    %13 = tpu.matmul %3, %12, %cst_13 {dimension_numbers = #tpu.dot_dimension_numbers<[1], [0], [0], [1], [0, 0, 1, 1], [], []>} : vector<16x32xbf16>, vector<32x32xbf16>, vector<16x32xf32> -> vector<16x32xf32>
    %14 = arith.truncf %13 : vector<16x32xf32> to vector<16x32xbf16>
    %c0_14 = arith.constant 0 : index
    %c0_15 = arith.constant 0 : index
    %15 = vector.load %arg11[%c0_14, %c0_15] : memref<16x32xbf16, #tpu.memory_space<vmem>>, vector<16x32xbf16>
    tpu.vector_store %arg11[%c0_14, %c0_15], %14 {strides = array<i32>} : memref<16x32xbf16, #tpu.memory_space<vmem>>, vector<16x32xbf16>,
    return
  }
  func.func @transform_0(%arg0: i32, %arg1: i32) -> (i32, i32) {
    %c0_i32 = arith.constant 0 : i32
    %c0_i32_0 = arith.constant 0 : i32
    return %arg0, %c0_i32 : i32, i32
  }
  func.func @transform_1(%arg0: i32, %arg1: i32) -> (i32, i32) {
    %c0_i32 = arith.constant 0 : i32
    %c0_i32_0 = arith.constant 0 : i32
    %c0_i32_1 = arith.constant 0 : i32
    return %c0_i32, %c0_i32_0 : i32, i32
  }
  func.func @transform_2(%arg0: i32, %arg1: i32) -> (i32, i32) {
    %c0_i32 = arith.constant 0 : i32
    %c0_i32_0 = arith.constant 0 : i32
    %c0_i32_1 = arith.constant 0 : i32
    return %c0_i32, %c0_i32_0 : i32, i32
  }
  func.func @transform_3(%arg0: i32, %arg1: i32) -> (i32, i32) {
    %c0_i32 = arith.constant 0 : i32
    %c0_i32_0 = arith.constant 0 : i32
    return %c0_i32, %arg1 : i32, i32
  }
  func.func @transform_4(%arg0: i32, %arg1: i32) -> (i32, i32) {
    %c0_i32 = arith.constant 0 : i32
    %c0_i32_0 = arith.constant 0 : i32
    return %c0_i32, %arg1 : i32, i32
  }
  func.func @transform_5(%arg0: i32, %arg1: i32) -> (i32, i32) {
    %c0_i32 = arith.constant 0 : i32
    %c0_i32_0 = arith.constant 0 : i32
    return %c0_i32, %arg1 : i32, i32
  }
  func.func @transform_6(%arg0: i32, %arg1: i32) -> (i32, i32) {
    %c0_i32 = arith.constant 0 : i32
    %c0_i32_0 = arith.constant 0 : i32
    return %arg0, %c0_i32 : i32, i32
  }
  func.func @transform_7(%arg0: i32, %arg1: i32) -> (i32, i32) {
    %c0_i32 = arith.constant 0 : i32
    return %arg0, %arg1 : i32, i32
  }
  func.func @transform_8(%arg0: i32, %arg1: i32) -> (i32, i32) {
    %c0_i32 = arith.constant 0 : i32
    return %arg0, %arg1 : i32, i32
  }
  func.func @transform_9(%arg0: i32, %arg1: i32) -> (i32, i32) {
    %c0_i32 = arith.constant 0 : i32
    return %arg0, %arg1 : i32, i32
  }
}

module attributes {stable_mosaic.version = 11 : i64} {
  func.func @_flash_attn_kernel(%arg0: i32, %arg1: i32, %arg2: i32, %arg3: memref<1x8x32xbf16, #tpu.memory_space<vmem>>, %arg4: memref<1x8x32xbf16, #tpu.memory_space<vmem>>, %arg5: memref<1x8x32xbf16, #tpu.memory_space<vmem>>, %arg6: memref<1x8x32xbf16, #tpu.memory_space<vmem>>, %arg7: memref<8x2xf32, #tpu.memory_space<vmem>>, %arg8: memref<8x2xf32, #tpu.memory_space<vmem>>, %arg9: memref<8x32xf32, #tpu.memory_space<vmem>>) attributes {dimension_semantics = [#tpu.dimension_semantics<parallel>, #tpu.dimension_semantics<parallel>, #tpu.dimension_semantics<arbitrary>], iteration_bounds = array<i64: 2, 1, 1>, scalar_prefetch = 0 : i64, scratch_operands = 3 : i64, tpu.core_type = #tpu.core_type<tc>, window_params = [{transform_indices = @transform_0, window_bounds = array<i64: 1, 8, 32>}, {transform_indices = @transform_1, window_bounds = array<i64: 1, 8, 32>}, {transform_indices = @transform_2, window_bounds = array<i64: 1, 8, 32>}, {transform_indices = @transform_3, window_bounds = array<i64: 1, 8, 32>}]} {
    %c0_i32 = arith.constant 0 : i32
    %0 = arith.cmpi eq, %arg2, %c0_i32 : i32
    %1 = arith.extui %0 : i1 to i32
    %c0_i32_0 = arith.constant 0 : i32
    %2 = arith.cmpi ne, %1, %c0_i32_0 : i32
    scf.if %2 {
      %cst = arith.constant 0xFF800000 : f32
      %12 = vector.broadcast %cst : f32 to vector<8x2xf32>
      %c0 = arith.constant 0 : index
      %c0_5 = arith.constant 0 : index
      %13 = vector.load %arg7[%c0, %c0_5] : memref<8x2xf32, #tpu.memory_space<vmem>>, vector<8x2xf32>
      tpu.vector_store %arg7[%c0, %c0_5], %12 {strides = array<i32>} : memref<8x2xf32, #tpu.memory_space<vmem>>, vector<8x2xf32>,
      %cst_6 = arith.constant 0.000000e+00 : f32
      %14 = vector.broadcast %cst_6 : f32 to vector<8x2xf32>
      %c0_7 = arith.constant 0 : index
      %c0_8 = arith.constant 0 : index
      %15 = vector.load %arg8[%c0_7, %c0_8] : memref<8x2xf32, #tpu.memory_space<vmem>>, vector<8x2xf32>
      tpu.vector_store %arg8[%c0_7, %c0_8], %14 {strides = array<i32>} : memref<8x2xf32, #tpu.memory_space<vmem>>, vector<8x2xf32>,
      %cst_9 = arith.constant 0.000000e+00 : f32
      %16 = vector.broadcast %cst_9 : f32 to vector<8x32xf32>
      %c0_10 = arith.constant 0 : index
      %c0_11 = arith.constant 0 : index
      %17 = vector.load %arg9[%c0_10, %c0_11] : memref<8x32xf32, #tpu.memory_space<vmem>>, vector<8x32xf32>
      tpu.vector_store %arg9[%c0_10, %c0_11], %16 {strides = array<i32>} : memref<8x32xf32, #tpu.memory_space<vmem>>, vector<8x32xf32>,
    } else {
    }
    %c8_i32 = arith.constant 8 : i32
    %3 = arith.muli %arg2, %c8_i32 : i32
    %c8_i32_1 = arith.constant 8 : i32
    %4 = arith.muli %arg1, %c8_i32_1 : i32
    %c7_i32 = arith.constant 7 : i32
    %5 = arith.addi %4, %c7_i32 : i32
    %6 = arith.cmpi sle, %3, %5 : i32
    %7 = arith.extui %6 : i1 to i32
    %c0_i32_2 = arith.constant 0 : i32
    %8 = arith.cmpi ne, %7, %c0_i32_2 : i32
    scf.if %8 {
      %12 = tpu.iota {dimensions = array<i32: 0>} : vector<8x8xi32>
      %c8_i32_5 = arith.constant 8 : i32
      %13 = arith.muli %arg1, %c8_i32_5 : i32
      %14 = vector.broadcast %13 : i32 to vector<8x8xi32>
      %15 = arith.addi %12, %14 : vector<8x8xi32>
      %16 = tpu.iota {dimensions = array<i32: 1>} : vector<8x8xi32>
      %c8_i32_6 = arith.constant 8 : i32
      %17 = arith.muli %arg2, %c8_i32_6 : i32
      %18 = vector.broadcast %17 : i32 to vector<8x8xi32>
      %19 = arith.addi %16, %18 : vector<8x8xi32>
      %20 = arith.cmpi sle, %19, %15 : vector<8x8xi32>
      %cst = arith.constant 0.000000e+00 : f32
      %cst_7 = arith.constant -1.000000e+10 : f32
      %21 = vector.broadcast %cst : f32 to vector<8x8xf32>
      %22 = vector.broadcast %cst_7 : f32 to vector<8x8xf32>
      %23 = arith.select %20, %21, %22 : vector<8x8xi1>, vector<8x8xf32>
      %c0 = arith.constant 0 : index
      %c0_8 = arith.constant 0 : index
      %c0_9 = arith.constant 0 : index
      %24 = vector.load %arg3[%c0, %c0_8, %c0_9] : memref<1x8x32xbf16, #tpu.memory_space<vmem>>, vector<1x8x32xbf16>
      %25 = vector.shape_cast %24 : vector<1x8x32xbf16> to vector<8x32xbf16>
      %c0_10 = arith.constant 0 : index
      %c0_11 = arith.constant 0 : index
      %c0_12 = arith.constant 0 : index
      %26 = vector.load %arg4[%c0_10, %c0_11, %c0_12] : memref<1x8x32xbf16, #tpu.memory_space<vmem>>, vector<1x8x32xbf16>
      %27 = vector.shape_cast %26 : vector<1x8x32xbf16> to vector<8x32xbf16>
      %c0_13 = arith.constant 0 : index
      %c0_14 = arith.constant 0 : index
      %c0_15 = arith.constant 0 : index
      %28 = vector.load %arg5[%c0_13, %c0_14, %c0_15] : memref<1x8x32xbf16, #tpu.memory_space<vmem>>, vector<1x8x32xbf16>
      %29 = vector.shape_cast %28 : vector<1x8x32xbf16> to vector<8x32xbf16>
      %30 = vector.extract_strided_slice %25 {offsets = [0, 0], sizes = [8, 16], strides = [1, 1]} : vector<8x32xbf16> to vector<8x16xbf16>
      %31 = vector.extract_strided_slice %27 {offsets = [0, 0], sizes = [8, 16], strides = [1, 1]} : vector<8x32xbf16> to vector<8x16xbf16>
      %32 = vector.extract_strided_slice %29 {offsets = [0, 0], sizes = [8, 16], strides = [1, 1]} : vector<8x32xbf16> to vector<8x16xbf16>
      %cst_16 = arith.constant dense<0.000000e+00> : vector<8x8xf32>
      %33 = tpu.matmul %30, %31, %cst_16 {dimension_numbers = #tpu.dot_dimension_numbers<[1], [1], [0], [0], [0, 0, 1, 0], [], []>} : vector<8x16xbf16>, vector<8x16xbf16>, vector<8x8xf32> -> vector<8x8xf32>
      %34 = arith.addf %33, %23 : vector<8x8xf32>
      %c0_17 = arith.constant 0 : index
      %c0_18 = arith.constant 0 : index
      %35 = vector.load %arg7[%c0_17, %c0_18] : memref<8x2xf32, #tpu.memory_space<vmem>>, vector<8x1xf32>
      %cst_19 = arith.constant dense<0xFF800000> : vector<8xf32>
      %36 = vector.multi_reduction <maximumf>, %34, %cst_19 [1] : vector<8x8xf32> to vector<8xf32>
      %37 = vector.shape_cast %36 : vector<8xf32> to vector<8x1xf32>
      %38 = arith.maximumf %35, %37 : vector<8x1xf32>
      %39 = arith.subf %35, %38 : vector<8x1xf32>
      %40 = math.exp %39 : vector<8x1xf32>
      %41 = vector.broadcast %38 : vector<8x1xf32> to vector<8x8xf32>
      %42 = arith.subf %34, %41 : vector<8x8xf32>
      %43 = math.exp %42 : vector<8x8xf32>
      %c0_20 = arith.constant 0 : index
      %c0_21 = arith.constant 0 : index
      %44 = vector.load %arg8[%c0_20, %c0_21] : memref<8x2xf32, #tpu.memory_space<vmem>>, vector<8x1xf32>
      %45 = arith.mulf %40, %44 : vector<8x1xf32>
      %cst_22 = arith.constant dense<0.000000e+00> : vector<8xf32>
      %46 = vector.multi_reduction <add>, %43, %cst_22 [1] : vector<8x8xf32> to vector<8xf32>
      %47 = vector.shape_cast %46 : vector<8xf32> to vector<8x1xf32>
      %48 = arith.addf %45, %47 : vector<8x1xf32>
      %c0_23 = arith.constant 0 : index
      %c0_24 = arith.constant 0 : index
      %49 = vector.load %arg8[%c0_23, %c0_24] : memref<8x2xf32, #tpu.memory_space<vmem>>, vector<8x1xf32>
      tpu.vector_store %arg8[%c0_23, %c0_24], %48 {strides = array<i32>} : memref<8x2xf32, #tpu.memory_space<vmem>>, vector<8x1xf32>,
      %c0_25 = arith.constant 0 : index
      %c0_26 = arith.constant 0 : index
      %50 = vector.load %arg9[%c0_25, %c0_26] : memref<8x32xf32, #tpu.memory_space<vmem>>, vector<8x16xf32>
      %51 = vector.broadcast %40 : vector<8x1xf32> to vector<8x16xf32>
      %52 = arith.mulf %51, %50 : vector<8x16xf32>
      %53 = arith.truncf %43 : vector<8x8xf32> to vector<8x8xbf16>
      %cst_27 = arith.constant dense<0.000000e+00> : vector<8x16xf32>
      %54 = tpu.matmul %53, %32, %cst_27 {dimension_numbers = #tpu.dot_dimension_numbers<[1], [0], [0], [1], [0, 0, 1, 1], [], []>} : vector<8x8xbf16>, vector<8x16xbf16>, vector<8x16xf32> -> vector<8x16xf32>
      %55 = arith.addf %52, %54 : vector<8x16xf32>
      %c0_28 = arith.constant 0 : index
      %c0_29 = arith.constant 0 : index
      %56 = vector.load %arg9[%c0_28, %c0_29] : memref<8x32xf32, #tpu.memory_space<vmem>>, vector<8x16xf32>
      tpu.vector_store %arg9[%c0_28, %c0_29], %55 {strides = array<i32>} : memref<8x32xf32, #tpu.memory_space<vmem>>, vector<8x16xf32>,
      %c0_30 = arith.constant 0 : index
      %c0_31 = arith.constant 0 : index
      %57 = vector.load %arg7[%c0_30, %c0_31] : memref<8x2xf32, #tpu.memory_space<vmem>>, vector<8x1xf32>
      tpu.vector_store %arg7[%c0_30, %c0_31], %38 {strides = array<i32>} : memref<8x2xf32, #tpu.memory_space<vmem>>, vector<8x1xf32>,
      %58 = vector.extract_strided_slice %25 {offsets = [0, 16], sizes = [8, 16], strides = [1, 1]} : vector<8x32xbf16> to vector<8x16xbf16>
      %59 = vector.extract_strided_slice %27 {offsets = [0, 16], sizes = [8, 16], strides = [1, 1]} : vector<8x32xbf16> to vector<8x16xbf16>
      %60 = vector.extract_strided_slice %29 {offsets = [0, 16], sizes = [8, 16], strides = [1, 1]} : vector<8x32xbf16> to vector<8x16xbf16>
      %cst_32 = arith.constant dense<0.000000e+00> : vector<8x8xf32>
      %61 = tpu.matmul %58, %59, %cst_32 {dimension_numbers = #tpu.dot_dimension_numbers<[1], [1], [0], [0], [0, 0, 1, 0], [], []>} : vector<8x16xbf16>, vector<8x16xbf16>, vector<8x8xf32> -> vector<8x8xf32>
      %62 = arith.addf %61, %23 : vector<8x8xf32>
      %c0_33 = arith.constant 0 : index
      %c1 = arith.constant 1 : index
      %63 = vector.load %arg7[%c0_33, %c1] : memref<8x2xf32, #tpu.memory_space<vmem>>, vector<8x1xf32>
      %cst_34 = arith.constant dense<0xFF800000> : vector<8xf32>
      %64 = vector.multi_reduction <maximumf>, %62, %cst_34 [1] : vector<8x8xf32> to vector<8xf32>
      %65 = vector.shape_cast %64 : vector<8xf32> to vector<8x1xf32>
      %66 = arith.maximumf %63, %65 : vector<8x1xf32>
      %67 = arith.subf %63, %66 : vector<8x1xf32>
      %68 = math.exp %67 : vector<8x1xf32>
      %69 = vector.broadcast %66 : vector<8x1xf32> to vector<8x8xf32>
      %70 = arith.subf %62, %69 : vector<8x8xf32>
      %71 = math.exp %70 : vector<8x8xf32>
      %c0_35 = arith.constant 0 : index
      %c1_36 = arith.constant 1 : index
      %72 = vector.load %arg8[%c0_35, %c1_36] : memref<8x2xf32, #tpu.memory_space<vmem>>, vector<8x1xf32>
      %73 = arith.mulf %68, %72 : vector<8x1xf32>
      %cst_37 = arith.constant dense<0.000000e+00> : vector<8xf32>
      %74 = vector.multi_reduction <add>, %71, %cst_37 [1] : vector<8x8xf32> to vector<8xf32>
      %75 = vector.shape_cast %74 : vector<8xf32> to vector<8x1xf32>
      %76 = arith.addf %73, %75 : vector<8x1xf32>
      %c0_38 = arith.constant 0 : index
      %c1_39 = arith.constant 1 : index
      %77 = vector.load %arg8[%c0_38, %c1_39] : memref<8x2xf32, #tpu.memory_space<vmem>>, vector<8x1xf32>
      tpu.vector_store %arg8[%c0_38, %c1_39], %76 {strides = array<i32>} : memref<8x2xf32, #tpu.memory_space<vmem>>, vector<8x1xf32>,
      %c0_40 = arith.constant 0 : index
      %c16 = arith.constant 16 : index
      %78 = vector.load %arg9[%c0_40, %c16] : memref<8x32xf32, #tpu.memory_space<vmem>>, vector<8x16xf32>
      %79 = vector.broadcast %68 : vector<8x1xf32> to vector<8x16xf32>
      %80 = arith.mulf %79, %78 : vector<8x16xf32>
      %81 = arith.truncf %71 : vector<8x8xf32> to vector<8x8xbf16>
      %cst_41 = arith.constant dense<0.000000e+00> : vector<8x16xf32>
      %82 = tpu.matmul %81, %60, %cst_41 {dimension_numbers = #tpu.dot_dimension_numbers<[1], [0], [0], [1], [0, 0, 1, 1], [], []>} : vector<8x8xbf16>, vector<8x16xbf16>, vector<8x16xf32> -> vector<8x16xf32>
      %83 = arith.addf %80, %82 : vector<8x16xf32>
      %c0_42 = arith.constant 0 : index
      %c16_43 = arith.constant 16 : index
      %84 = vector.load %arg9[%c0_42, %c16_43] : memref<8x32xf32, #tpu.memory_space<vmem>>, vector<8x16xf32>
      tpu.vector_store %arg9[%c0_42, %c16_43], %83 {strides = array<i32>} : memref<8x32xf32, #tpu.memory_space<vmem>>, vector<8x16xf32>,
      %c0_44 = arith.constant 0 : index
      %c1_45 = arith.constant 1 : index
      %85 = vector.load %arg7[%c0_44, %c1_45] : memref<8x2xf32, #tpu.memory_space<vmem>>, vector<8x1xf32>
      tpu.vector_store %arg7[%c0_44, %c1_45], %66 {strides = array<i32>} : memref<8x2xf32, #tpu.memory_space<vmem>>, vector<8x1xf32>,
    } else {
    }
    %c0_i32_3 = arith.constant 0 : i32
    %9 = arith.cmpi eq, %arg2, %c0_i32_3 : i32
    %10 = arith.extui %9 : i1 to i32
    %c0_i32_4 = arith.constant 0 : i32
    %11 = arith.cmpi ne, %10, %c0_i32_4 : i32
    scf.if %11 {
      %c0 = arith.constant 0 : index
      %c0_5 = arith.constant 0 : index
      %12 = vector.load %arg9[%c0, %c0_5] : memref<8x32xf32, #tpu.memory_space<vmem>>, vector<8x16xf32>
      %c0_6 = arith.constant 0 : index
      %c0_7 = arith.constant 0 : index
      %13 = vector.load %arg8[%c0_6, %c0_7] : memref<8x2xf32, #tpu.memory_space<vmem>>, vector<8x1xf32>
      %14 = tpu.reciprocal %13 {approx = true} : vector<8x1xf32> -> vector<8x1xf32>
      %15 = vector.broadcast %14 : vector<8x1xf32> to vector<8x16xf32>
      %16 = arith.mulf %12, %15 : vector<8x16xf32>
      %c0_8 = arith.constant 0 : index
      %c0_9 = arith.constant 0 : index
      %17 = vector.load %arg9[%c0_8, %c0_9] : memref<8x32xf32, #tpu.memory_space<vmem>>, vector<8x16xf32>
      tpu.vector_store %arg9[%c0_8, %c0_9], %16 {strides = array<i32>} : memref<8x32xf32, #tpu.memory_space<vmem>>, vector<8x16xf32>,
      %c0_10 = arith.constant 0 : index
      %c16 = arith.constant 16 : index
      %18 = vector.load %arg9[%c0_10, %c16] : memref<8x32xf32, #tpu.memory_space<vmem>>, vector<8x16xf32>
      %c0_11 = arith.constant 0 : index
      %c1 = arith.constant 1 : index
      %19 = vector.load %arg8[%c0_11, %c1] : memref<8x2xf32, #tpu.memory_space<vmem>>, vector<8x1xf32>
      %20 = tpu.reciprocal %19 {approx = true} : vector<8x1xf32> -> vector<8x1xf32>
      %21 = vector.broadcast %20 : vector<8x1xf32> to vector<8x16xf32>
      %22 = arith.mulf %18, %21 : vector<8x16xf32>
      %c0_12 = arith.constant 0 : index
      %c16_13 = arith.constant 16 : index
      %23 = vector.load %arg9[%c0_12, %c16_13] : memref<8x32xf32, #tpu.memory_space<vmem>>, vector<8x16xf32>
      tpu.vector_store %arg9[%c0_12, %c16_13], %22 {strides = array<i32>} : memref<8x32xf32, #tpu.memory_space<vmem>>, vector<8x16xf32>,
      %c0_14 = arith.constant 0 : index
      %c0_15 = arith.constant 0 : index
      %24 = vector.load %arg9[%c0_14, %c0_15] : memref<8x32xf32, #tpu.memory_space<vmem>>, vector<8x32xf32>
      %25 = arith.truncf %24 : vector<8x32xf32> to vector<8x32xbf16>
      %c0_16 = arith.constant 0 : index
      %c0_17 = arith.constant 0 : index
      %c0_18 = arith.constant 0 : index
      %26 = vector.load %arg6[%c0_16, %c0_17, %c0_18] : memref<1x8x32xbf16, #tpu.memory_space<vmem>>, vector<1x8x32xbf16>
      %27 = vector.shape_cast %26 : vector<1x8x32xbf16> to vector<8x32xbf16>
      %28 = vector.shape_cast %25 : vector<8x32xbf16> to vector<1x8x32xbf16>
      tpu.vector_store %arg6[%c0_16, %c0_17, %c0_18], %28 {strides = array<i32>} : memref<1x8x32xbf16, #tpu.memory_space<vmem>>, vector<1x8x32xbf16>,
    } else {
    }
    return
  }
  func.func @transform_0(%arg0: i32, %arg1: i32, %arg2: i32) -> (i32, i32, i32) {
    %c0_i32 = arith.constant 0 : i32
    %c0_i32_0 = arith.constant 0 : i32
    return %arg0, %arg1, %c0_i32 : i32, i32, i32
  }
  func.func @transform_1(%arg0: i32, %arg1: i32, %arg2: i32) -> (i32, i32, i32) {
    %c0_i32 = arith.constant 0 : i32
    %c0_i32_0 = arith.constant 0 : i32
    return %arg0, %arg2, %c0_i32 : i32, i32, i32
  }
  func.func @transform_2(%arg0: i32, %arg1: i32, %arg2: i32) -> (i32, i32, i32) {
    %c0_i32 = arith.constant 0 : i32
    %c0_i32_0 = arith.constant 0 : i32
    return %arg0, %arg2, %c0_i32 : i32, i32, i32
  }
  func.func @transform_3(%arg0: i32, %arg1: i32, %arg2: i32) -> (i32, i32, i32) {
    %c0_i32 = arith.constant 0 : i32
    %c0_i32_0 = arith.constant 0 : i32
    return %arg0, %arg1, %c0_i32 : i32, i32, i32
  }
}

module attributes {stable_mosaic.version = 11 : i64} {
  func.func @_mlp_kernel(%arg0: i32, %arg1: i32, %arg2: memref<16x32xbf16, #tpu.memory_space<vmem>>, %arg3: memref<16x32xbf16, #tpu.memory_space<vmem>>, %arg4: memref<1x32xf32, #tpu.memory_space<vmem>>, %arg5: memref<1x32xf32, #tpu.memory_space<vmem>>, %arg6: memref<1x32xf32, #tpu.memory_space<vmem>>, %arg7: memref<32x64xbf16, #tpu.memory_space<vmem>>, %arg8: memref<1x64xf32, #tpu.memory_space<vmem>>, %arg9: memref<64x32xbf16, #tpu.memory_space<vmem>>, %arg10: memref<1x32xf32, #tpu.memory_space<vmem>>, %arg11: memref<16x32xf32, #tpu.memory_space<vmem>>, %arg12: memref<16x32xbf16, #tpu.memory_space<vmem>>) attributes {dimension_semantics = [#tpu.dimension_semantics<parallel>, #tpu.dimension_semantics<arbitrary>], iteration_bounds = array<i64: 1, 1>, scalar_prefetch = 0 : i64, scratch_operands = 1 : i64, tpu.core_type = #tpu.core_type<tc>, window_params = [{transform_indices = @transform_0, window_bounds = array<i64: 16, 32>}, {transform_indices = @transform_1, window_bounds = array<i64: 16, 32>}, {pipeline_mode = #tpu.pipeline_mode<synchronous>, transform_indices = @transform_2, window_bounds = array<i64: 1, 32>}, {pipeline_mode = #tpu.pipeline_mode<synchronous>, transform_indices = @transform_3, window_bounds = array<i64: 1, 32>}, {pipeline_mode = #tpu.pipeline_mode<synchronous>, transform_indices = @transform_4, window_bounds = array<i64: 1, 32>}, {transform_indices = @transform_5, window_bounds = array<i64: 32, 64>}, {transform_indices = @transform_6, window_bounds = array<i64: 1, 64>}, {transform_indices = @transform_7, window_bounds = array<i64: 64, 32>}, {pipeline_mode = #tpu.pipeline_mode<synchronous>, transform_indices = @transform_8, window_bounds = array<i64: 1, 32>}, {transform_indices = @transform_9, window_bounds = array<i64: 16, 32>}]} {
    %c0_i32 = arith.constant 0 : i32
    %0 = arith.cmpi eq, %arg1, %c0_i32 : i32
    %1 = arith.extui %0 : i1 to i32
    %c0_i32_0 = arith.constant 0 : i32
    %2 = arith.cmpi ne, %1, %c0_i32_0 : i32
    scf.if %2 {
      %c0_16 = arith.constant 0 : index
      %c0_17 = arith.constant 0 : index
      %20 = vector.load %arg2[%c0_16, %c0_17] : memref<16x32xbf16, #tpu.memory_space<vmem>>, vector<16x32xbf16>
      %21 = arith.extf %20 : vector<16x32xbf16> to vector<16x32xf32>
      %c0_18 = arith.constant 0 : index
      %c0_19 = arith.constant 0 : index
      %22 = vector.load %arg3[%c0_18, %c0_19] : memref<16x32xbf16, #tpu.memory_space<vmem>>, vector<16x32xbf16>
      %23 = arith.extf %22 : vector<16x32xbf16> to vector<16x32xf32>
      %c0_20 = arith.constant 0 : index
      %c0_21 = arith.constant 0 : index
      %24 = vector.load %arg4[%c0_20, %c0_21] : memref<1x32xf32, #tpu.memory_space<vmem>>, vector<1x32xf32>
      %25 = vector.broadcast %24 : vector<1x32xf32> to vector<16x32xf32>
      %26 = arith.mulf %23, %25 : vector<16x32xf32>
      %27 = arith.addf %21, %26 : vector<16x32xf32>
      %c0_22 = arith.constant 0 : index
      %c0_23 = arith.constant 0 : index
      %28 = vector.load %arg5[%c0_22, %c0_23] : memref<1x32xf32, #tpu.memory_space<vmem>>, vector<1x32xf32>
      %c0_24 = arith.constant 0 : index
      %c0_25 = arith.constant 0 : index
      %29 = vector.load %arg6[%c0_24, %c0_25] : memref<1x32xf32, #tpu.memory_space<vmem>>, vector<1x32xf32>
      %cst_26 = arith.constant dense<0.000000e+00> : vector<16xf32>
      %30 = vector.multi_reduction <add>, %27, %cst_26 [1] : vector<16x32xf32> to vector<16xf32>
      %31 = vector.shape_cast %30 : vector<16xf32> to vector<16x1xf32>
      %cst_27 = arith.constant 3.200000e+01 : f32
      %32 = vector.broadcast %cst_27 : f32 to vector<16x1xf32>
      %33 = arith.divf %31, %32 : vector<16x1xf32>
      %34 = vector.broadcast %33 : vector<16x1xf32> to vector<16x32xf32>
      %35 = arith.subf %27, %34 : vector<16x32xf32>
      %36 = arith.mulf %35, %35 : vector<16x32xf32>
      %cst_28 = arith.constant dense<0.000000e+00> : vector<16xf32>
      %37 = vector.multi_reduction <add>, %36, %cst_28 [1] : vector<16x32xf32> to vector<16xf32>
      %38 = vector.shape_cast %37 : vector<16xf32> to vector<16x1xf32>
      %cst_29 = arith.constant 3.200000e+01 : f32
      %39 = vector.broadcast %cst_29 : f32 to vector<16x1xf32>
      %40 = arith.divf %38, %39 : vector<16x1xf32>
      %41 = vector.broadcast %33 : vector<16x1xf32> to vector<16x32xf32>
      %42 = arith.subf %27, %41 : vector<16x32xf32>
      %cst_30 = arith.constant 0.00999999977 : f32
      %43 = vector.broadcast %cst_30 : f32 to vector<16x1xf32>
      %44 = arith.addf %40, %43 : vector<16x1xf32>
      %45 = math.rsqrt %44 : vector<16x1xf32>
      %46 = vector.broadcast %45 : vector<16x1xf32> to vector<16x32xf32>
      %47 = arith.mulf %42, %46 : vector<16x32xf32>
      %48 = vector.broadcast %28 : vector<1x32xf32> to vector<16x32xf32>
      %49 = arith.mulf %47, %48 : vector<16x32xf32>
      %50 = vector.broadcast %29 : vector<1x32xf32> to vector<16x32xf32>
      %51 = arith.addf %49, %50 : vector<16x32xf32>
      %52 = arith.truncf %51 : vector<16x32xf32> to vector<16x32xbf16>
      %c0_31 = arith.constant 0 : index
      %c0_32 = arith.constant 0 : index
      %53 = vector.load %arg12[%c0_31, %c0_32] : memref<16x32xbf16, #tpu.memory_space<vmem>>, vector<16x32xbf16>
      tpu.vector_store %arg12[%c0_31, %c0_32], %52 {strides = array<i32>} : memref<16x32xbf16, #tpu.memory_space<vmem>>, vector<16x32xbf16>,
      %c0_33 = arith.constant 0 : index
      %c0_34 = arith.constant 0 : index
      %54 = vector.load %arg11[%c0_33, %c0_34] : memref<16x32xf32, #tpu.memory_space<vmem>>, vector<16x32xf32>
      tpu.vector_store %arg11[%c0_33, %c0_34], %51 {strides = array<i32>} : memref<16x32xf32, #tpu.memory_space<vmem>>, vector<16x32xf32>,
    } else {
    }
    %c0 = arith.constant 0 : index
    %c0_1 = arith.constant 0 : index
    %3 = vector.load %arg12[%c0, %c0_1] : memref<16x32xbf16, #tpu.memory_space<vmem>>, vector<16x32xbf16>
    %c0_2 = arith.constant 0 : index
    %c0_3 = arith.constant 0 : index
    %4 = vector.load %arg7[%c0_2, %c0_3] : memref<32x64xbf16, #tpu.memory_space<vmem>>, vector<32x64xbf16>
    %cst = arith.constant dense<0.000000e+00> : vector<16x64xf32>
    %5 = tpu.matmul %3, %4, %cst {dimension_numbers = #tpu.dot_dimension_numbers<[1], [0], [0], [1], [0, 0, 1, 1], [], []>} : vector<16x32xbf16>, vector<32x64xbf16>, vector<16x64xf32> -> vector<16x64xf32>
    %c0_4 = arith.constant 0 : index
    %c0_5 = arith.constant 0 : index
    %6 = vector.load %arg8[%c0_4, %c0_5] : memref<1x64xf32, #tpu.memory_space<vmem>>, vector<1x64xf32>
    %7 = vector.broadcast %6 : vector<1x64xf32> to vector<16x64xf32>
    %8 = arith.addf %5, %7 : vector<16x64xf32>
    %cst_6 = arith.constant 0.000000e+00 : f32
    %9 = vector.broadcast %cst_6 : f32 to vector<16x64xf32>
    %10 = arith.maximumf %8, %9 : vector<16x64xf32>
    %c0_7 = arith.constant 0 : index
    %c0_8 = arith.constant 0 : index
    %11 = vector.load %arg11[%c0_7, %c0_8] : memref<16x32xf32, #tpu.memory_space<vmem>>, vector<16x32xf32>
    %12 = arith.truncf %10 : vector<16x64xf32> to vector<16x64xbf16>
    %c0_9 = arith.constant 0 : index
    %c0_10 = arith.constant 0 : index
    %13 = vector.load %arg9[%c0_9, %c0_10] : memref<64x32xbf16, #tpu.memory_space<vmem>>, vector<64x32xbf16>
    %cst_11 = arith.constant dense<0.000000e+00> : vector<16x32xf32>
    %14 = tpu.matmul %12, %13, %cst_11 {dimension_numbers = #tpu.dot_dimension_numbers<[1], [0], [0], [1], [0, 0, 1, 1], [], []>} : vector<16x64xbf16>, vector<64x32xbf16>, vector<16x32xf32> -> vector<16x32xf32>
    %15 = arith.addf %11, %14 : vector<16x32xf32>
    %c0_12 = arith.constant 0 : index
    %c0_13 = arith.constant 0 : index
    %16 = vector.load %arg11[%c0_12, %c0_13] : memref<16x32xf32, #tpu.memory_space<vmem>>, vector<16x32xf32>
    tpu.vector_store %arg11[%c0_12, %c0_13], %15 {strides = array<i32>} : memref<16x32xf32, #tpu.memory_space<vmem>>, vector<16x32xf32>,
    %c0_i32_14 = arith.constant 0 : i32
    %17 = arith.cmpi eq, %arg1, %c0_i32_14 : i32
    %18 = arith.extui %17 : i1 to i32
    %c0_i32_15 = arith.constant 0 : i32
    %19 = arith.cmpi ne, %18, %c0_i32_15 : i32
    scf.if %19 {
      %c0_16 = arith.constant 0 : index
      %c0_17 = arith.constant 0 : index
      %20 = vector.load %arg11[%c0_16, %c0_17] : memref<16x32xf32, #tpu.memory_space<vmem>>, vector<16x32xf32>
      %c0_18 = arith.constant 0 : index
      %c0_19 = arith.constant 0 : index
      %21 = vector.load %arg10[%c0_18, %c0_19] : memref<1x32xf32, #tpu.memory_space<vmem>>, vector<1x32xf32>
      %22 = vector.broadcast %21 : vector<1x32xf32> to vector<16x32xf32>
      %23 = arith.addf %20, %22 : vector<16x32xf32>
      %c0_20 = arith.constant 0 : index
      %c0_21 = arith.constant 0 : index
      %24 = vector.load %arg11[%c0_20, %c0_21] : memref<16x32xf32, #tpu.memory_space<vmem>>, vector<16x32xf32>
      tpu.vector_store %arg11[%c0_20, %c0_21], %23 {strides = array<i32>} : memref<16x32xf32, #tpu.memory_space<vmem>>, vector<16x32xf32>,
    } else {
    }
    return
  }
  func.func @transform_0(%arg0: i32, %arg1: i32) -> (i32, i32) {
    %c0_i32 = arith.constant 0 : i32
    %c0_i32_0 = arith.constant 0 : i32
    return %arg0, %c0_i32 : i32, i32
  }
  func.func @transform_1(%arg0: i32, %arg1: i32) -> (i32, i32) {
    %c0_i32 = arith.constant 0 : i32
    %c0_i32_0 = arith.constant 0 : i32
    return %arg0, %c0_i32 : i32, i32
  }
  func.func @transform_2(%arg0: i32, %arg1: i32) -> (i32, i32) {
    %c0_i32 = arith.constant 0 : i32
    %c0_i32_0 = arith.constant 0 : i32
    %c0_i32_1 = arith.constant 0 : i32
    return %c0_i32, %c0_i32_0 : i32, i32
  }
  func.func @transform_3(%arg0: i32, %arg1: i32) -> (i32, i32) {
    %c0_i32 = arith.constant 0 : i32
    %c0_i32_0 = arith.constant 0 : i32
    %c0_i32_1 = arith.constant 0 : i32
    return %c0_i32, %c0_i32_0 : i32, i32
  }
  func.func @transform_4(%arg0: i32, %arg1: i32) -> (i32, i32) {
    %c0_i32 = arith.constant 0 : i32
    %c0_i32_0 = arith.constant 0 : i32
    %c0_i32_1 = arith.constant 0 : i32
    return %c0_i32, %c0_i32_0 : i32, i32
  }
  func.func @transform_5(%arg0: i32, %arg1: i32) -> (i32, i32) {
    %c0_i32 = arith.constant 0 : i32
    %c0_i32_0 = arith.constant 0 : i32
    return %c0_i32, %arg1 : i32, i32
  }
  func.func @transform_6(%arg0: i32, %arg1: i32) -> (i32, i32) {
    %c0_i32 = arith.constant 0 : i32
    %c0_i32_0 = arith.constant 0 : i32
    return %c0_i32, %arg1 : i32, i32
  }
  func.func @transform_7(%arg0: i32, %arg1: i32) -> (i32, i32) {
    %c0_i32 = arith.constant 0 : i32
    %c0_i32_0 = arith.constant 0 : i32
    return %arg1, %c0_i32 : i32, i32
  }
  func.func @transform_8(%arg0: i32, %arg1: i32) -> (i32, i32) {
    %c0_i32 = arith.constant 0 : i32
    %c0_i32_0 = arith.constant 0 : i32
    %c0_i32_1 = arith.constant 0 : i32
    return %c0_i32, %c0_i32_0 : i32, i32
  }
  func.func @transform_9(%arg0: i32, %arg1: i32) -> (i32, i32) {
    %c0_i32 = arith.constant 0 : i32
    %c0_i32_0 = arith.constant 0 : i32
    return %arg0, %c0_i32 : i32, i32
  }
}

module attributes {stable_mosaic.version = 11 : i64} {
  func.func @_unembed_kernel(%arg0: i32, %arg1: i32, %arg2: memref<2x32xf32, #tpu.memory_space<vmem>>, %arg3: memref<1x32xf32, #tpu.memory_space<vmem>>, %arg4: memref<1x32xf32, #tpu.memory_space<vmem>>, %arg5: memref<32x16xbf16, #tpu.memory_space<vmem>>, %arg6: memref<2x16xf32, #tpu.memory_space<vmem>>, %arg7: memref<2x32xbf16, #tpu.memory_space<vmem>>) attributes {dimension_semantics = [#tpu.dimension_semantics<parallel>, #tpu.dimension_semantics<arbitrary>], iteration_bounds = array<i64: 1, 1>, scalar_prefetch = 0 : i64, scratch_operands = 1 : i64, tpu.core_type = #tpu.core_type<tc>, window_params = [{transform_indices = @transform_0, window_bounds = array<i64: 2, 32>}, {pipeline_mode = #tpu.pipeline_mode<synchronous>, transform_indices = @transform_1, window_bounds = array<i64: 1, 32>}, {pipeline_mode = #tpu.pipeline_mode<synchronous>, transform_indices = @transform_2, window_bounds = array<i64: 1, 32>}, {transform_indices = @transform_3, window_bounds = array<i64: 32, 16>}, {transform_indices = @transform_4, window_bounds = array<i64: 2, 16>}]} {
    %c0_i32 = arith.constant 0 : i32
    %0 = arith.cmpi eq, %arg1, %c0_i32 : i32
    %1 = arith.extui %0 : i1 to i32
    %c0_i32_0 = arith.constant 0 : i32
    %2 = arith.cmpi ne, %1, %c0_i32_0 : i32
    scf.if %2 {
      %c0_6 = arith.constant 0 : index
      %c0_7 = arith.constant 0 : index
      %7 = vector.load %arg2[%c0_6, %c0_7] : memref<2x32xf32, #tpu.memory_space<vmem>>, vector<2x32xf32>
      %c0_8 = arith.constant 0 : index
      %c0_9 = arith.constant 0 : index
      %8 = vector.load %arg3[%c0_8, %c0_9] : memref<1x32xf32, #tpu.memory_space<vmem>>, vector<1x32xf32>
      %c0_10 = arith.constant 0 : index
      %c0_11 = arith.constant 0 : index
      %9 = vector.load %arg4[%c0_10, %c0_11] : memref<1x32xf32, #tpu.memory_space<vmem>>, vector<1x32xf32>
      %cst_12 = arith.constant dense<0.000000e+00> : vector<2xf32>
      %10 = vector.multi_reduction <add>, %7, %cst_12 [1] : vector<2x32xf32> to vector<2xf32>
      %11 = vector.shape_cast %10 : vector<2xf32> to vector<2x1xf32>
      %cst_13 = arith.constant 3.200000e+01 : f32
      %12 = vector.broadcast %cst_13 : f32 to vector<2x1xf32>
      %13 = arith.divf %11, %12 : vector<2x1xf32>
      %14 = vector.broadcast %13 : vector<2x1xf32> to vector<2x32xf32>
      %15 = arith.subf %7, %14 : vector<2x32xf32>
      %16 = arith.mulf %15, %15 : vector<2x32xf32>
      %cst_14 = arith.constant dense<0.000000e+00> : vector<2xf32>
      %17 = vector.multi_reduction <add>, %16, %cst_14 [1] : vector<2x32xf32> to vector<2xf32>
      %18 = vector.shape_cast %17 : vector<2xf32> to vector<2x1xf32>
      %cst_15 = arith.constant 3.200000e+01 : f32
      %19 = vector.broadcast %cst_15 : f32 to vector<2x1xf32>
      %20 = arith.divf %18, %19 : vector<2x1xf32>
      %21 = vector.broadcast %13 : vector<2x1xf32> to vector<2x32xf32>
      %22 = arith.subf %7, %21 : vector<2x32xf32>
      %cst_16 = arith.constant 0.00999999977 : f32
      %23 = vector.broadcast %cst_16 : f32 to vector<2x1xf32>
      %24 = arith.addf %20, %23 : vector<2x1xf32>
      %25 = math.rsqrt %24 : vector<2x1xf32>
      %26 = vector.broadcast %25 : vector<2x1xf32> to vector<2x32xf32>
      %27 = arith.mulf %22, %26 : vector<2x32xf32>
      %28 = vector.broadcast %8 : vector<1x32xf32> to vector<2x32xf32>
      %29 = arith.mulf %27, %28 : vector<2x32xf32>
      %30 = vector.broadcast %9 : vector<1x32xf32> to vector<2x32xf32>
      %31 = arith.addf %29, %30 : vector<2x32xf32>
      %32 = arith.truncf %31 : vector<2x32xf32> to vector<2x32xbf16>
      %c0_17 = arith.constant 0 : index
      %c0_18 = arith.constant 0 : index
      %33 = vector.load %arg7[%c0_17, %c0_18] : memref<2x32xbf16, #tpu.memory_space<vmem>>, vector<2x32xbf16>
      tpu.vector_store %arg7[%c0_17, %c0_18], %32 {strides = array<i32>} : memref<2x32xbf16, #tpu.memory_space<vmem>>, vector<2x32xbf16>,
    } else {
    }
    %c0 = arith.constant 0 : index
    %c0_1 = arith.constant 0 : index
    %3 = vector.load %arg7[%c0, %c0_1] : memref<2x32xbf16, #tpu.memory_space<vmem>>, vector<2x32xbf16>
    %c0_2 = arith.constant 0 : index
    %c0_3 = arith.constant 0 : index
    %4 = vector.load %arg5[%c0_2, %c0_3] : memref<32x16xbf16, #tpu.memory_space<vmem>>, vector<32x16xbf16>
    %cst = arith.constant dense<0.000000e+00> : vector<2x16xf32>
    %5 = tpu.matmul %3, %4, %cst {dimension_numbers = #tpu.dot_dimension_numbers<[1], [0], [0], [1], [0, 0, 1, 1], [], []>} : vector<2x32xbf16>, vector<32x16xbf16>, vector<2x16xf32> -> vector<2x16xf32>
    %c0_4 = arith.constant 0 : index
    %c0_5 = arith.constant 0 : index
    %6 = vector.load %arg6[%c0_4, %c0_5] : memref<2x16xf32, #tpu.memory_space<vmem>>, vector<2x16xf32>
    tpu.vector_store %arg6[%c0_4, %c0_5], %5 {strides = array<i32>} : memref<2x16xf32, #tpu.memory_space<vmem>>, vector<2x16xf32>,
    return
  }
  func.func @transform_0(%arg0: i32, %arg1: i32) -> (i32, i32) {
    %c0_i32 = arith.constant 0 : i32
    %c0_i32_0 = arith.constant 0 : i32
    return %arg0, %c0_i32 : i32, i32
  }
  func.func @transform_1(%arg0: i32, %arg1: i32) -> (i32, i32) {
    %c0_i32 = arith.constant 0 : i32
    %c0_i32_0 = arith.constant 0 : i32
    %c0_i32_1 = arith.constant 0 : i32
    return %c0_i32, %c0_i32_0 : i32, i32
  }
  func.func @transform_2(%arg0: i32, %arg1: i32) -> (i32, i32) {
    %c0_i32 = arith.constant 0 : i32
    %c0_i32_0 = arith.constant 0 : i32
    %c0_i32_1 = arith.constant 0 : i32
    return %c0_i32, %c0_i32_0 : i32, i32
  }
  func.func @transform_3(%arg0: i32, %arg1: i32) -> (i32, i32) {
    %c0_i32 = arith.constant 0 : i32
    %c0_i32_0 = arith.constant 0 : i32
    return %c0_i32, %arg1 : i32, i32
  }
  func.func @transform_4(%arg0: i32, %arg1: i32) -> (i32, i32) {
    %c0_i32 = arith.constant 0 : i32
    return %arg0, %arg1 : i32, i32
  }
}

</mosaic_0001>

<llo_original>
// kernel: transformer_forward.8
$region0: #{transformer_forward.8}
  #allocation0 [shape = 'u32[]', space=smem, size = 0x4, offset = 0x4, fixed_abs, tag = 'smem constant byte address 0x4 - core index']
  #allocation1 [shape = 'u32[72,128]{1,0:T(1,128)}', space=vmem, size = 0x9000, scoped, tag = 'internal scratch']
  #allocation2 [shape = 'f32[8,2]{1,0:T(8,128)}', space=vmem, size = 0x1000, scoped, tag = 'scratch operand']
  #allocation3 [shape = 'f32[8,2]{1,0:T(8,128)}', space=vmem, size = 0x1000, scoped, tag = 'scratch operand']
  #allocation4 [shape = 'f32[8,32]{1,0:T(8,128)}', space=vmem, size = 0x1000, scoped, tag = 'scratch operand']
  %s0 = inlined_call_operand.vmem [shape: bf16[2,8,32], index: 0, kind: input, shape index: {}]
  %s1 = inlined_call_operand.vmem [shape: bf16[2,8,32], index: 1, kind: input, shape index: {}]
  %s2 = inlined_call_operand.vmem [shape: bf16[2,8,32], index: 2, kind: input, shape index: {}]
  %s3 = inlined_call_operand.vmem [shape: bf16[2,8,32], index: 3, kind: output, shape index: {}]
  %s4 = sld [smem:[#allocation0]]
  $region57: #{transformer_forward.8} parent=0
    _
  %s6 = ssub.s32 1, %s4
  %s7 = scalar_select 0, %s6, %s4
  loop: start=0, step=1, limit=4
  $region2: #{transformer_forward.8} parent=0 // loop_pre_header
    _
  $region3: #{transformer_forward.8} parent=0 // loop_header
    %s9 = sphi 0, %s13
    %p10 = scmp.ge.s32.totalorder %s9, 4
    %s16 = sphi 0, %s35
    %s17 = sphi 0, %s31
    %s18 = sphi 0, %s27
    %s19 = sphi 0, %s16
    %s20 = sphi 0, %s17
    %s21 = sphi 0, %s18
    %s22 = sphi 0, %s19
    %s23 = sphi 0, %s20
    %s24 = sphi 0, %s21
    %s40 = sphi 0, %s42
    %s43 = sphi 0, %s40
    %s44 = sphi 0, %s43
    %s60 = sphi 0, %s44
    %s68 = sphi 0, %s70
    %s71 = sphi 0, %s68
    %s72 = sphi 0, %s71
    %s88 = sphi 0, %s72
    %s96 = sphi 0, %s98
    %s99 = sphi 0, %s96
    %s100 = sphi 0, %s99
    %s116 = sphi 0, %s100
    %s124 = sphi 0, %s126
    %s127 = sphi 0, %s124
    %s128 = sphi 0, %s127
    %s144 = sphi 0, %s128
  $region4: #{transformer_forward.8} parent=0 // loop_header_branch
    %12 = sbr.rel (%p10) target = $region8
  $region5: #{transformer_forward.8} parent=0 // loop_body
    %s14 = ssub.s32 %s9, 1
    %s15 = ssub.s32 %s9, 2
    %s25 = sadd.s32 1, %s18
    %p26 = scmp.ge.s32.totalorder %s25, 1
    %s27 = scalar_select %p26, 0, %s25
    %s28 = sadd.s32 1, %s17
    %s29 = scalar_select %p26, %s28, %s17
    %p30 = scmp.ge.s32.totalorder %s29, 1
    %s31 = scalar_select %p30, 0, %s29
    %s32 = sadd.s32 1, %s16
    %s33 = scalar_select %p30, %s32, %s16
    %p34 = scmp.ge.s32.totalorder %s33, 2
    %s35 = scalar_select %p34, 0, %s33
    %s36 = ssub.s32 %s16, %s35
    %s37 = ssub.s32 %s17, %s31
    %s38 = sor.u32 %s36, %s37
    %p39 = scmp.eq.s32.totalorder %s38, 0
    %s41 = sadd.s32 %s40, 1
    %s42 = scalar_select %p39, %s40, %s41
    %p45 = pneg %p39
    %p46 = scmp.eq.s32.totalorder %s9, 1
    %p47 = por %p45, %p46
    %p48 = scmp.ne.s32.totalorder %s40, %s43
    %p49 = scmp.eq.s32.totalorder %s9, 0
    %p50 = por %p48, %p49
    %p51 = scmp.ne.s32.totalorder %s40, %s43
    %p52 = scmp.eq.s32.totalorder %s14, 1
    %p53 = por %p51, %p52
    %p54 = scmp.ne.s32.totalorder %s43, %s44
    %p55 = scmp.eq.s32.totalorder %s14, 0
    %p56 = por %p54, %p55
    %p57 = scmp.ne.s32.totalorder %s43, %s44
    %p58 = scmp.eq.s32.totalorder %s15, 1
    %p59 = por %p57, %p58
    %p61 = scmp.ne.s32.totalorder %s44, %s60
    %p62 = scmp.eq.s32.totalorder %s15, 0
    %p63 = por %p61, %p62
    %s64 = ssub.s32 %s16, %s35
    %s65 = ssub.s32 %s18, %s27
    %s66 = sor.u32 %s64, %s65
    %p67 = scmp.eq.s32.totalorder %s66, 0
    %s69 = sadd.s32 %s68, 1
    %s70 = scalar_select %p67, %s68, %s69
    %p73 = pneg %p67
    %p74 = scmp.eq.s32.totalorder %s9, 1
    %p75 = por %p73, %p74
    %p76 = scmp.ne.s32.totalorder %s68, %s71
    %p77 = scmp.eq.s32.totalorder %s9, 0
    %p78 = por %p76, %p77
    %p79 = scmp.ne.s32.totalorder %s68, %s71
    %p80 = scmp.eq.s32.totalorder %s14, 1
    %p81 = por %p79, %p80
    %p82 = scmp.ne.s32.totalorder %s71, %s72
    %p83 = scmp.eq.s32.totalorder %s14, 0
    %p84 = por %p82, %p83
    %p85 = scmp.ne.s32.totalorder %s71, %s72
    %p86 = scmp.eq.s32.totalorder %s15, 1
    %p87 = por %p85, %p86
    %p89 = scmp.ne.s32.totalorder %s72, %s88
    %p90 = scmp.eq.s32.totalorder %s15, 0
    %p91 = por %p89, %p90
    %s92 = ssub.s32 %s16, %s35
    %s93 = ssub.s32 %s18, %s27
    %s94 = sor.u32 %s92, %s93
    %p95 = scmp.eq.s32.totalorder %s94, 0
    %s97 = sadd.s32 %s96, 1
    %s98 = scalar_select %p95, %s96, %s97
    %p101 = pneg %p95
    %p102 = scmp.eq.s32.totalorder %s9, 1
    %p103 = por %p101, %p102
    %p104 = scmp.ne.s32.totalorder %s96, %s99
    %p105 = scmp.eq.s32.totalorder %s9, 0
    %p106 = por %p104, %p105
    %p107 = scmp.ne.s32.totalorder %s96, %s99
    %p108 = scmp.eq.s32.totalorder %s14, 1
    %p109 = por %p107, %p108
    %p110 = scmp.ne.s32.totalorder %s99, %s100
    %p111 = scmp.eq.s32.totalorder %s14, 0
    %p112 = por %p110, %p111
    %p113 = scmp.ne.s32.totalorder %s99, %s100
    %p114 = scmp.eq.s32.totalorder %s15, 1
    %p115 = por %p113, %p114
    %p117 = scmp.ne.s32.totalorder %s100, %s116
    %p118 = scmp.eq.s32.totalorder %s15, 0
    %p119 = por %p117, %p118
    %s120 = ssub.s32 %s16, %s35
    %s121 = ssub.s32 %s17, %s31
    %s122 = sor.u32 %s120, %s121
    %p123 = scmp.eq.s32.totalorder %s122, 0
    %s125 = sadd.s32 %s124, 1
    %s126 = scalar_select %p123, %s124, %s125
    %p129 = pneg %p123
    %p130 = scmp.eq.s32.totalorder %s9, 1
    %p131 = por %p129, %p130
    %p132 = scmp.ne.s32.totalorder %s124, %s127
    %p133 = scmp.eq.s32.totalorder %s9, 0
    %p134 = por %p132, %p133
    %p135 = scmp.ne.s32.totalorder %s124, %s127
    %p136 = scmp.eq.s32.totalorder %s14, 1
    %p137 = por %p135, %p136
    %p138 = scmp.ne.s32.totalorder %s127, %s128
    %p139 = scmp.eq.s32.totalorder %s14, 0
    %p140 = por %p138, %p139
    %p141 = scmp.ne.s32.totalorder %s127, %s128
    %p142 = scmp.eq.s32.totalorder %s15, 1
    %p143 = por %p141, %p142
    %p145 = scmp.ne.s32.totalorder %s128, %s144
    %p146 = scmp.eq.s32.totalorder %s15, 0
    %p147 = por %p145, %p146
    %p148 = scmp.le.s32.totalorder 1, %s9
    %p149 = scmp.lt.s32.totalorder %s9, 3
    %p150 = pnand %p148, %p149
    %p151 = pneg %p150
    // Predicated region
    $region9: #{transformer_forward.8} parent=5 // pred_check
      _
    $region10: #{transformer_forward.8} parent=5 // pred_check_branch
      %153 = sbr.rel (%p150) target = $region12
    $region11: #{transformer_forward.8} parent=5 // pred_region
      %s154 = ssub.s32 %s9, 1
    $region12: #{transformer_forward.8} parent=5 // pred_fallthru
      _
    %p155 = scmp.lt.s32.totalorder %s9, 2
    // Predicated region
    $region13: #{transformer_forward.8} parent=5 // pred_check
      %p156 = pneg %p155
    $region14: #{transformer_forward.8} parent=5 // pred_check_branch
      %158 = sbr.rel (%p156) target = $region16
    $region15: #{transformer_forward.8} parent=5 // pred_region
      // Predicated region
      $region17: #{transformer_forward.8} parent=15 // pred_check
        %p159 = pneg %p50
      $region18: #{transformer_forward.8} parent=15 // pred_check_branch
        %161 = sbr.rel (%p159) target = $region20
      $region19: #{transformer_forward.8} parent=15 // pred_region
        %p162 = scmp.lt.s32.totalorder %s16, 1
        %s163 = scalar_select %p162, %s16, 1
        %p164 = scmp.lt.s32.totalorder %s17, 0
        %s165 = scalar_select %p164, %s17, 0
        %s166 = sadd.s32 %s165, %s163
        %s167 = smul.addr %s166, 4
        %s168 = scalar_lea.vmem %s0, %s167
      $region20: #{transformer_forward.8} parent=15 // pred_fallthru
        _
      // Predicated region
      $region21: #{transformer_forward.8} parent=15 // pred_check
        %p169 = pneg %p78
      $region22: #{transformer_forward.8} parent=15 // pred_check_branch
        %171 = sbr.rel (%p169) target = $region24
      $region23: #{transformer_forward.8} parent=15 // pred_region
        %p172 = scmp.lt.s32.totalorder %s16, 1
        %s173 = scalar_select %p172, %s16, 1
        %p174 = scmp.lt.s32.totalorder %s18, 0
        %s175 = scalar_select %p174, %s18, 0
        %s176 = sadd.s32 %s175, %s173
        %s177 = smul.addr %s176, 4
        %s178 = scalar_lea.vmem %s1, %s177
      $region24: #{transformer_forward.8} parent=15 // pred_fallthru
        _
      // Predicated region
      $region25: #{transformer_forward.8} parent=15 // pred_check
        %p179 = pneg %p106
      $region26: #{transformer_forward.8} parent=15 // pred_check_branch
        %181 = sbr.rel (%p179) target = $region28
      $region27: #{transformer_forward.8} parent=15 // pred_region
        %p182 = scmp.lt.s32.totalorder %s16, 1
        %s183 = scalar_select %p182, %s16, 1
        %p184 = scmp.lt.s32.totalorder %s18, 0
        %s185 = scalar_select %p184, %s18, 0
        %s186 = sadd.s32 %s185, %s183
        %s187 = smul.addr %s186, 4
        %s188 = scalar_lea.vmem %s2, %s187
      $region28: #{transformer_forward.8} parent=15 // pred_fallthru
        _
    $region16: #{transformer_forward.8} parent=5 // pred_fallthru
      _
    %p189 = scmp.le.s32.totalorder 1, %s9
    %p190 = scmp.lt.s32.totalorder %s9, 3
    %p191 = pnand %p189, %p190
    %p192 = pneg %p191
    // Predicated region
    $region29: #{transformer_forward.8} parent=5 // pred_check
      _
    $region30: #{transformer_forward.8} parent=5 // pred_check_branch
      %194 = sbr.rel (%p191) target = $region32
    $region31: #{transformer_forward.8} parent=5 // pred_region
      %s195 = ssub.s32 %s9, 1
      %p196 = scmp.lt.s32.totalorder %s19, 1
      %s197 = scalar_select %p196, %s19, 1
      %p198 = scmp.lt.s32.totalorder %s20, 0
      %s199 = scalar_select %p198, %s20, 0
      %s200 = sadd.s32 %s199, %s197
      %s201 = smul.addr %s200, 4
      %s202 = scalar_lea.vmem %s0, %s201
      %p203 = pneg %p56
      %p204 = pneg %p53
      %p205 = scmp.lt.s32.totalorder %s19, 1
      %s206 = scalar_select %p205, %s19, 1
      %p207 = scmp.lt.s32.totalorder %s21, 0
      %s208 = scalar_select %p207, %s21, 0
      %s209 = sadd.s32 %s208, %s206
      %s210 = smul.addr %s209, 4
      %s211 = scalar_lea.vmem %s1, %s210
      %p212 = pneg %p84
      %p213 = pneg %p81
      %p214 = scmp.lt.s32.totalorder %s19, 1
      %s215 = scalar_select %p214, %s19, 1
      %p216 = scmp.lt.s32.totalorder %s21, 0
      %s217 = scalar_select %p216, %s21, 0
      %s218 = sadd.s32 %s217, %s215
      %s219 = smul.addr %s218, 4
      %s220 = scalar_lea.vmem %s2, %s219
      %p221 = pneg %p112
      %p222 = pneg %p109
      %p223 = pneg %p140
      %p224 = pneg %p137
      %p225 = scmp.lt.s32.totalorder %s19, 1
      %s226 = scalar_select %p225, %s19, 1
      %p227 = scmp.lt.s32.totalorder %s20, 0
      %s228 = scalar_select %p227, %s20, 0
      %s229 = sadd.s32 %s228, %s226
      %s230 = smul.addr %s229, 4
      %s231 = scalar_lea.vmem %s3, %s230
      %p232 = scmp.lt.s32.totalorder %s19, 1
      %s233 = scalar_select %p232, %s19, 1
      %p234 = scmp.lt.s32.totalorder %s20, 0
      %s235 = scalar_select %p234, %s20, 0
      %s236 = sadd.s32 %s235, %s233
      %s237 = smul.addr %s236, 4
      %s238 = scalar_lea.vmem %s0, %s237
      %p239 = scmp.lt.s32.totalorder %s19, 1
      %s240 = scalar_select %p239, %s19, 1
      %p241 = scmp.lt.s32.totalorder %s21, 0
      %s242 = scalar_select %p241, %s21, 0
      %s243 = sadd.s32 %s242, %s240
      %s244 = smul.addr %s243, 4
      %s245 = scalar_lea.vmem %s1, %s244
      %p246 = scmp.lt.s32.totalorder %s19, 1
      %s247 = scalar_select %p246, %s19, 1
      %p248 = scmp.lt.s32.totalorder %s21, 0
      %s249 = scalar_select %p248, %s21, 0
      %s250 = sadd.s32 %s249, %s247
      %s251 = smul.addr %s250, 4
      %s252 = scalar_lea.vmem %s2, %s251
      %p253 = scmp.lt.s32.totalorder %s19, 1
      %s254 = scalar_select %p253, %s19, 1
      %p255 = scmp.lt.s32.totalorder %s20, 0
      %s256 = scalar_select %p255, %s20, 0
      %s257 = sadd.s32 %s256, %s254
      %s258 = smul.addr %s257, 4
      %s259 = scalar_lea.vmem %s3, %s258
      %p261 = scmp.eq.s32.totalorder %s21, 0
      // Predicated region
      $region33: #{transformer_forward.8} parent=31 // pred_check
        %p262 = pneg %p261
      $region34: #{transformer_forward.8} parent=31 // pred_check_branch
        %264 = sbr.rel (%p262) target = $region36
      $region35: #{transformer_forward.8} parent=31 // pred_region
        %vm265 = vcmask 15360
        %266 = vst.msk [vmem:[#allocation2] sm:$0xff] %vm265, -inf
        %267 = vst.msk [vmem:[#allocation3] sm:$0xff] %vm265, 0.0
        %vm268 = vcmask 261120
        %269 = vst.msk [vmem:[#allocation4] sm:$0xff] %vm268, 0.0
      $region36: #{transformer_forward.8} parent=31 // pred_fallthru
        _
      %s270 = smul.u32 %s21, 8
      %s271 = smul.u32 %s20, 8
      %s272 = sadd.s32 %s271, 7
      %p273 = scmp.le.s32.totalorder %s270, %s272
      // Predicated region
      $region37: #{transformer_forward.8} parent=31 // pred_check
        %p274 = pneg %p273
      $region38: #{transformer_forward.8} parent=31 // pred_check_branch
        %276 = sbr.rel (%p274) target = $region40
      $region39: #{transformer_forward.8} parent=31 // pred_region
        %v277 = vlaneseq
        %v278 = vshrl.u32 %v277, 7
        %v279 = vstv %s271
        %v280 = vadd.s32 %v278, %v279
        %v281 = vlaneseq
        %v282 = vand.u32 %v281, 127
        %v283 = vstv %s270
        %v284 = vadd.s32 %v282, %v283
        %vm285 = vcmp.le.s32.totalorder %v284, %v280
        %v286 = vsel %vm285, 0.0, -1e+10
        %v287 = vld [vmem:[%s238] sm:$0xf]
        %v288 = vld [vmem:[%s245] sm:$0xf]
        %v289 = vld [vmem:[%s252] sm:$0xf]
        %vm290 = vcmask 130048
        %v292 = vsel %vm290, %v287, 0
        %v295 = vsel %vm290, %v288, 0
        %297 = vmatpush.bf16.xpose.msra.mxu0 0
        %298 = vmatpush.bf16.xpose.msra.mxu0 0
        %299 = vmatpush.bf16.xpose.msra.mxu0 0
        %300 = vmatpush.bf16.xpose.msra.mxu0 0
        %301 = vmatpush.bf16.xpose.msra.mxu0 0
        %302 = vmatpush.bf16.xpose.msra.mxu0 0
        %303 = vmatpush.bf16.xpose.msra.mxu0 0
        %304 = vmatpush.bf16.xpose.msra.mxu0 %v295
        %305 = vmatmul.bf16.gmra.mxu0 %v292
        %v306 = vpop.f32.mrf.mxu0
        %v307 = vadd.f32 %v286, %v306
        %v308 = vpop.f32.mrf.mxu0
        %309 = vdwg.mxu0
        %v310 = vld [vmem:[#allocation2] sm:$0xff]
        %vm311 = vcmask 64512
        %v312 = vsel %vm311, %v307, -inf
        %313 = vmax.xlane.f32.xlu0 %v312
        %v314 = vpop.xlane.xlu0 %313
        %v315 = vmax.f32 %v310, %v314
        %v316 = vsub.f32 %v310, %v315
        %v317 = vmul.f32 %v316, 1.442695
        %v318 = vpow.pop %v317
        %320 = vset.pattern.permute.xlu0 0
        %321 = vperm.xlu0 %320, %v315
        %v322 = vpop.permute.xlu0 %321
        %v324 = vsub.f32 %v307, %v322
        %v325 = vmul.f32 %v324, 1.442695
        %v326 = vpow.pop %v325
        %v327 = vld [vmem:[#allocation3] sm:$0xff]
        %v328 = vmul.f32 %v318, %v327
        %v329 = vsel %vm311, %v326, 0.0
        %330 = vadd.xlane.f32.xlu0 %v329
        %v331 = vpop.xlane.xlu0 %330
        %v332 = vadd.f32 %v328, %v331
        %vm333 = vcmask 7168
        %334 = vst.msk [vmem:[#allocation3] sm:$0xff] %vm333, %v332
        %v335 = vld [vmem:[#allocation4] sm:$0xff]
        %337 = vset.pattern.permute.xlu0 0
        %338 = vperm.xlu0 %337, %v318
        %v339 = vpop.permute.xlu0 %338
        %v341 = vmul.f32 %v339, %v335
        %v342 = vpack.c.bf16 %v326, %v326
        %v344 = vsel %vm311, %v342, 0
        %vm346 = vcmask 1043456
        %v348 = vsel %vm346, %v289, 0
        %350 = vmatpush.bf16.msra.mxu0 0
        %351 = vmatpush.bf16.msra.mxu0 0
        %352 = vmatpush.bf16.msra.mxu0 0
        %353 = vmatpush.bf16.msra.mxu0 0
        %354 = vmatpush.bf16.msra.mxu0 0
        %355 = vmatpush.bf16.msra.mxu0 0
        %356 = vmatpush.bf16.msra.mxu0 0
        %357 = vmatpush.bf16.msra.mxu0 %v348
        %358 = vmatmul.bf16.gmra.mxu0 %v344
        %v359 = vpop.f32.mrf.mxu0
        %v360 = vadd.f32 0.0, %v359
        %v361 = vpop.f32.mrf.mxu0
        %362 = vdwg.mxu0
        %v363 = vadd.f32 %v341, %v360
        %364 = vst.msk [vmem:[#allocation4] sm:$0xff] %vm290, %v363
        %365 = vst.msk [vmem:[#allocation2] sm:$0xff] %vm333, %v315
        %v367 = vunpack.c.l.b16 %v287
        %v368 = vpack.c.b16 %v367, %v367
        %369 = vrot.lane.b32.xlu0 %v368, 112
        %v370 = vpop.permute.xlu0 %369
        %v372 = vunpack.c.l.b16 %v288
        %v373 = vpack.c.b16 %v372, %v372
        %374 = vrot.lane.b32.xlu0 %v373, 112
        %v375 = vpop.permute.xlu0 %374
        %v377 = vsel %vm290, %v370, 0
        %v380 = vsel %vm290, %v375, 0
        %382 = vmatpush.bf16.xpose.msra.mxu0 0
        %383 = vmatpush.bf16.xpose.msra.mxu0 0
        %384 = vmatpush.bf16.xpose.msra.mxu0 0
        %385 = vmatpush.bf16.xpose.msra.mxu0 0
        %386 = vmatpush.bf16.xpose.msra.mxu0 0
        %387 = vmatpush.bf16.xpose.msra.mxu0 0
        %388 = vmatpush.bf16.xpose.msra.mxu0 0
        %389 = vmatpush.bf16.xpose.msra.mxu0 %v380
        %390 = vmatmul.bf16.gmra.mxu0 %v377
        %v391 = vpop.f32.mrf.mxu0
        %v392 = vadd.f32 %v286, %v391
        %v393 = vpop.f32.mrf.mxu0
        %394 = vdwg.mxu0
        %v395 = vld [vmem:[#allocation2] sm:$0xff]
        %v396 = vsel %vm311, %v392, -inf
        %397 = vmax.xlane.f32.xlu0 %v396
        %v398 = vpop.xlane.xlu0 %397
        %v399 = vmax.f32 %v395, %v398
        %v400 = vsub.f32 %v395, %v399
        %v401 = vmul.f32 %v400, 1.442695
        %v402 = vpow.pop %v401
        %404 = vset.pattern.permute.xlu0 1
        %405 = vperm.xlu0 %404, %v399
        %v406 = vpop.permute.xlu0 %405
        %v408 = vsub.f32 %v392, %v406
        %v409 = vmul.f32 %v408, 1.442695
        %v410 = vpow.pop %v409
        %v411 = vld [vmem:[#allocation3] sm:$0xff]
        %v412 = vmul.f32 %v402, %v411
        %v413 = vsel %vm311, %v410, 0.0
        %414 = vadd.xlane.f32.xlu0 %v413
        %v415 = vpop.xlane.xlu0 %414
        %v416 = vadd.f32 %v412, %v415
        %vm417 = vcmask 15368
        %418 = vst.msk [vmem:[#allocation3] sm:$0xff] %vm417, %v416
        %v419 = vld [vmem:[#allocation4] sm:$0xff]
        %421 = vset.pattern.permute.xlu0 1
        %422 = vperm.xlu0 %421, %v402
        %v423 = vpop.permute.xlu0 %422
        %v425 = vmul.f32 %v423, %v419
        %v426 = vpack.c.bf16 %v410, %v410
        %v428 = vunpack.c.l.b16 %v289
        %v429 = vpack.c.b16 %v428, %v428
        %430 = vrot.lane.b32.xlu0 %v429, 112
        %v431 = vpop.permute.xlu0 %430
        %v433 = vsel %vm311, %v426, 0
        %v436 = vsel %vm346, %v431, 0
        %438 = vmatpush.bf16.msra.mxu0 0
        %439 = vmatpush.bf16.msra.mxu0 0
        %440 = vmatpush.bf16.msra.mxu0 0
        %441 = vmatpush.bf16.msra.mxu0 0
        %442 = vmatpush.bf16.msra.mxu0 0
        %443 = vmatpush.bf16.msra.mxu0 0
        %444 = vmatpush.bf16.msra.mxu0 0
        %445 = vmatpush.bf16.msra.mxu0 %v436
        %446 = vmatmul.bf16.gmra.mxu0 %v433
        %v447 = vpop.f32.mrf.mxu0
        %v448 = vadd.f32 0.0, %v447
        %v449 = vpop.f32.mrf.mxu0
        %450 = vdwg.mxu0
        %452 = vrot.lane.b32.xlu0 %v448, 16
        %v453 = vpop.permute.xlu0 %452
        %v455 = vadd.f32 %v425, %v453
        %vm456 = vcmask 261248
        %457 = vst.msk [vmem:[#allocation4] sm:$0xff] %vm456, %v455
        %458 = vst.msk [vmem:[#allocation2] sm:$0xff] %vm417, %v399
      $region40: #{transformer_forward.8} parent=31 // pred_fallthru
        _
      // Predicated region
      $region41: #{transformer_forward.8} parent=31 // pred_check
        %p459 = pneg %p261
      $region42: #{transformer_forward.8} parent=31 // pred_check_branch
        %461 = sbr.rel (%p459) target = $region44
      $region43: #{transformer_forward.8} parent=31 // pred_region
        %v462 = vld [vmem:[#allocation4] sm:$0xff]
        %v463 = vld [vmem:[#allocation3] sm:$0xff]
        %v464 = vrcp.pop %v463
        %466 = vset.pattern.permute.xlu0 0
        %467 = vperm.xlu0 %466, %v464
        %v468 = vpop.permute.xlu0 %467
        %v470 = vmul.f32 %v462, %v468
        %vm471 = vcmask 130048
        %472 = vst.msk [vmem:[#allocation4] sm:$0xff] %vm471, %v470
        %v473 = vld [vmem:[#allocation4] sm:$0xff]
        %v474 = vld [vmem:[#allocation3] sm:$0xff]
        %v475 = vrcp.pop %v474
        %477 = vset.pattern.permute.xlu0 1
        %478 = vperm.xlu0 %477, %v475
        %v479 = vpop.permute.xlu0 %478
        %v481 = vmul.f32 %v473, %v479
        %vm482 = vcmask 261248
        %483 = vst.msk [vmem:[#allocation4] sm:$0xff] %vm482, %v481
        %v484 = vld [vmem:[#allocation4] sm:$0xff]
        %v485 = vpack.c.bf16 %v484, %v484
        %vm486 = vcmask 257024
        %487 = vst.msk [vmem:[%s259] sm:$0xf] %vm486, %v485
      $region44: #{transformer_forward.8} parent=31 // pred_fallthru
        _
      %p488 = scmp.lt.s32.totalorder %s19, 1
      %s489 = scalar_select %p488, %s19, 1
      %p490 = scmp.lt.s32.totalorder %s20, 0
      %s491 = scalar_select %p490, %s20, 0
      %s492 = sadd.s32 %s491, %s489
      %s493 = smul.addr %s492, 4
      %s494 = scalar_lea.vmem %s3, %s493
      // Predicated region
      $region45: #{transformer_forward.8} parent=31 // pred_check
        %p495 = pneg %p137
      $region46: #{transformer_forward.8} parent=31 // pred_check_branch
        %497 = sbr.rel (%p495) target = $region48
      $region47: #{transformer_forward.8} parent=31 // pred_region
        _
      $region48: #{transformer_forward.8} parent=31 // pred_fallthru
        _
    $region32: #{transformer_forward.8} parent=5 // pred_fallthru
      _
    %p498 = scmp.le.s32.totalorder 2, %s9
    // Predicated region
    $region49: #{transformer_forward.8} parent=5 // pred_check
      %p499 = pneg %p498
    $region50: #{transformer_forward.8} parent=5 // pred_check_branch
      %501 = sbr.rel (%p499) target = $region52
    $region51: #{transformer_forward.8} parent=5 // pred_region
      %s502 = ssub.s32 %s9, 2
      // Predicated region
      $region53: #{transformer_forward.8} parent=51 // pred_check
        %p503 = pneg %p143
      $region54: #{transformer_forward.8} parent=51 // pred_check_branch
        %505 = sbr.rel (%p503) target = $region56
      $region55: #{transformer_forward.8} parent=51 // pred_region
        %p506 = scmp.lt.s32.totalorder %s22, 1
        %s507 = scalar_select %p506, %s22, 1
        %p508 = scmp.lt.s32.totalorder %s23, 0
        %s509 = scalar_select %p508, %s23, 0
        %s510 = sadd.s32 %s509, %s507
        %s511 = smul.addr %s510, 4
        %s512 = scalar_lea.vmem %s3, %s511
      $region56: #{transformer_forward.8} parent=51 // pred_fallthru
        _
    $region52: #{transformer_forward.8} parent=5 // pred_fallthru
      _
  $region6: #{transformer_forward.8} parent=0 // loop_footer
    %s13 = sadd.s32 1, %s9
  $region7: #{transformer_forward.8} parent=0 // loop_footer_branch
    %8 = sbr.rel target = $region3
  $region8: #{transformer_forward.8} parent=0 // loop_exit
    _

// kernel: transformer_forward.13
$region0: #{transformer_forward.13}
  #allocation0 [shape = 'u32[]', space=smem, size = 0x4, offset = 0x4, fixed_abs, tag = 'smem constant byte address 0x4 - core index']
  #allocation1 [shape = 'u32[72,128]{1,0:T(1,128)}', space=vmem, size = 0x9000, scoped, tag = 'internal scratch']
  #allocation2 [shape = 'bf16[2,32]{1,0:T(2,128)(2,1)}', space=vmem, size = 0x200, scoped, tag = 'scratch operand']
  %s0 = inlined_call_operand.vmem [shape: f32[2,32], index: 0, kind: input, shape index: {}]
  %s1 = inlined_call_operand.vmem [shape: f32[1,32], index: 1, kind: input, shape index: {}]
  %s2 = inlined_call_operand.vmem [shape: f32[1,32], index: 2, kind: input, shape index: {}]
  %s3 = inlined_call_operand.vmem [shape: bf16[32,16], index: 3, kind: input, shape index: {}]
  %s4 = inlined_call_operand.hbm [shape: f32[2,16], index: 4, kind: output, shape index: {}]
  %s5 = sld [smem:[#allocation0]]
  $region30: #{transformer_forward.13} parent=0
    _
  %s7 = ssub.s32 1, %s5
  %s8 = scalar_select 0, %s7, %s5
  $region1: #{transformer_forward.13} parent=0
    #allocation3 [shape = 'u8[1024]{0}', space=vmem, size = 0x400, scoped, tag = 'output window, operand 0, single buffered']
    #allocation4 [shape = 's32[1]{0}', space=sflag, size = 0x4, scoped, tag = 'scoped memory for transformer_forward.13']
    %9 = vsyncpa [#allocation4], 0
    // Predicated region
    $region2: #{transformer_forward.13} parent=1 // pred_check
      _
    $region3: #{transformer_forward.13} parent=1 // pred_check_branch
      %11 = sbr.rel (0) target = $region5
    $region4: #{transformer_forward.13} parent=1 // pred_region
      _
    $region5: #{transformer_forward.13} parent=1 // pred_fallthru
      _
    // Predicated region
    $region6: #{transformer_forward.13} parent=1 // pred_check
      _
    $region7: #{transformer_forward.13} parent=1 // pred_check_branch
      %13 = sbr.rel (0) target = $region9
    $region8: #{transformer_forward.13} parent=1 // pred_region
      _
    $region9: #{transformer_forward.13} parent=1 // pred_fallthru
      _
    // Predicated region
    $region10: #{transformer_forward.13} parent=1 // pred_check
      _
    $region11: #{transformer_forward.13} parent=1 // pred_check_branch
      %15 = sbr.rel (0) target = $region13
    $region12: #{transformer_forward.13} parent=1 // pred_region
      _
    $region13: #{transformer_forward.13} parent=1 // pred_fallthru
      _
    // Predicated region
    $region14: #{transformer_forward.13} parent=1 // pred_check
      _
    $region15: #{transformer_forward.13} parent=1 // pred_check_branch
      %17 = sbr.rel (0) target = $region17
    $region16: #{transformer_forward.13} parent=1 // pred_region
      _
    $region17: #{transformer_forward.13} parent=1 // pred_fallthru
      _
    %p19 = scmp.eq.s32.totalorder 0, 0
    // Predicated region
    $region18: #{transformer_forward.13} parent=1 // pred_check
      %p20 = pneg %p19
    $region19: #{transformer_forward.13} parent=1 // pred_check_branch
      %22 = sbr.rel (%p20) target = $region21
    $region20: #{transformer_forward.13} parent=1 // pred_region
      %v23 = vld [vmem:[%s0] sm:$0x3]
      %v24 = vld [vmem:[%s1] sm:$0x1]
      %v25 = vld [vmem:[%s2] sm:$0x1]
      %vm26 = vcmask 254976
      %v27 = vsel %vm26, %v23, 0.0
      %28 = vadd.xlane.f32.xlu0 %v27
      %v29 = vpop.xlane.xlu0 %28
      %v30 = vrcp.pop 32.0
      %v31 = vmul.f32 32.0, %v30
      %v32 = vsub.f32 1.0, %v31
      %v33 = vmul.f32 %v30, %v32
      %v34 = vadd.f32 %v30, %v33
      %vm35 = vweird.f32 %v30
      %v36 = vsel %vm35, %v30, %v34
      %v37 = vmul.f32 %v29, %v36
      %v38 = vsub.f32 %v23, %v37
      %v39 = vmul.f32 %v38, %v38
      %v40 = vsel %vm26, %v39, 0.0
      %41 = vadd.xlane.f32.xlu0 %v40
      %v42 = vpop.xlane.xlu0 %41
      %v43 = vmul.f32 %v42, %v36
      %v44 = vadd.f32 %v43, 0.01
      %v45 = vrsqrt.pop %v44
      %v46 = vmul.f32 %v45, %v44
      %v47 = vmul.f32 %v46, %v45
      %v48 = vmul.f32 0.5, %v47
      %v49 = vsub.f32 1.5, %v48
      %v50 = vmul.f32 %v45, %v49
      %vm51 = vweird.f32 %v44
      %vm52 = vweird.f32 %v45
      %vm53 = vmor %vm51, %vm52
      %v54 = vsel %vm53, %v45, %v50
      %v55 = vmul.f32 %v38, %v54
      %v57 = vperm.slane %v24, 0
      %v59 = vmul.f32 %v55, %v57
      %v61 = vperm.slane %v25, 0
      %v63 = vadd.f32 %v59, %v61
      %v64 = vpack.c.bf16 %v63, %v63
      %vm65 = vcmask 253952
      %66 = vst.msk [vmem:[#allocation2] sm:$0x1] %vm65, %v64
    $region21: #{transformer_forward.13} parent=1 // pred_fallthru
      _
    %v67 = vld [vmem:[#allocation2] sm:$0x1]
    %v68 = vld [vmem:[%s3] sm:$0xf]
    %v69 = vld [vmem:[%s3 + $0x4] sm:$0xf]
    %v70 = vld [vmem:[%s3 + $0x8] sm:$0xf]
    %v71 = vld [vmem:[%s3 + $0xc] sm:$0xf]
    %v76 = vunpack.c.l.b16 %v68
    %v77 = vunpack.c.l.b16 %v69
    %v78 = vunpack.c.l.b16 %v70
    %v79 = vunpack.c.l.b16 %v71
    %v80 = vpack.c.b16 %v77, %v76
    %v81 = vpack.c.b16 %v79, %v78
    %vm84 = vcmask 261120
    %v86 = vsel %vm84, %v67, 0
    %88 = vmatpush.bf16.msra.mxu0 0
    %89 = vmatpush.bf16.msra.mxu0 0
    %90 = vmatpush.bf16.msra.mxu0 0
    %91 = vmatpush.bf16.msra.mxu0 0
    %92 = vmatpush.bf16.msra.mxu0 0
    %93 = vmatpush.bf16.msra.mxu0 0
    %94 = vmatpush.bf16.msra.mxu0 %v81
    %95 = vmatpush.bf16.msra.mxu0 %v80
    %96 = vmatmul.bf16.gmra.mxu0 %v86
    %v97 = vpop.f32.mrf.mxu0
    %v98 = vadd.f32 0.0, %v97
    %v99 = vpop.f32.mrf.mxu0
    %100 = vdwg.mxu0
    %vm101 = vcmask 123904
    %102 = vst.msk [vmem:[#allocation3] sm:$0x3] %vm101, %v98
    // Predicated region
    $region22: #{transformer_forward.13} parent=1 // pred_check
      _
    $region23: #{transformer_forward.13} parent=1 // pred_check_branch
      %104 = sbr.rel (0) target = $region25
    $region24: #{transformer_forward.13} parent=1 // pred_region
      %106 = vsyncadd [#allocation4], 0
      %s108 = sshll.u32 [#allocation3], 4
      %s109 = int_to_ptr.vmem [resolvable:$true] %s108
      %s110 = sshll.u32 %s4, 4
      %s111 = int_to_ptr.hbm [resolvable:$true] %s110
      %113 = dma.vmem_to_hbm [thread:$0]  %s109, 32, %s111, [#allocation4]
    $region25: #{transformer_forward.13} parent=1 // pred_fallthru
      _
    // Predicated region
    $region26: #{transformer_forward.13} parent=1 // pred_check
      _
    $region27: #{transformer_forward.13} parent=1 // pred_check_branch
      %115 = sbr.rel (0) target = $region29
    $region28: #{transformer_forward.13} parent=1 // pred_region
      %117 = dma.done [#allocation4], 32
    $region29: #{transformer_forward.13} parent=1 // pred_fallthru
      _
    %118 = vsyncpa [#allocation4], 1

// kernel: transformer_forward.7
$region0: #{transformer_forward.7}
  #allocation0 [shape = 'u32[]', space=smem, size = 0x4, offset = 0x4, fixed_abs, tag = 'smem constant byte address 0x4 - core index']
  #allocation1 [shape = 'u32[72,128]{1,0:T(1,128)}', space=vmem, size = 0x9000, scoped, tag = 'internal scratch']
  %s0 = inlined_call_operand.vmem [shape: f32[16,32], index: 0, kind: input, shape index: {}]
  %s1 = inlined_call_operand.vmem [shape: f32[1,32], index: 1, kind: input, shape index: {}]
  %s2 = inlined_call_operand.vmem [shape: f32[1,32], index: 2, kind: input, shape index: {}]
  %s3 = inlined_call_operand.vmem [shape: bf16[32,32], index: 3, kind: input, shape index: {}]
  %s4 = inlined_call_operand.vmem [shape: bf16[32,32], index: 4, kind: input, shape index: {}]
  %s5 = inlined_call_operand.vmem [shape: bf16[32,32], index: 5, kind: input, shape index: {}]
  %s6 = inlined_call_operand.vmem [shape: bf16[16,32], index: 6, kind: output, shape index: {0}]
  %s7 = inlined_call_operand.vmem [shape: bf16[16,32], index: 7, kind: output, shape index: {1}]
  %s8 = inlined_call_operand.vmem [shape: bf16[16,32], index: 8, kind: output, shape index: {2}]
  %s9 = inlined_call_operand.vmem [shape: bf16[16,32], index: 9, kind: output, shape index: {3}]
  %10 = xla_tuple %s6, %s7, %s8, %s9
  %s11 = sld [smem:[#allocation0]]
  $region62: #{transformer_forward.7} parent=0
    _
  %s13 = ssub.s32 1, %s11
  %s14 = scalar_select 0, %s13, %s11
  // Predicated region
  $region2: #{transformer_forward.7} parent=0 // pred_check
    _
  $region3: #{transformer_forward.7} parent=0 // pred_check_branch
    %16 = sbr.rel (0) target = $region5
  $region4: #{transformer_forward.7} parent=0 // pred_region
    _
  $region5: #{transformer_forward.7} parent=0 // pred_fallthru
    _
  // Predicated region
  $region6: #{transformer_forward.7} parent=0 // pred_check
    _
  $region7: #{transformer_forward.7} parent=0 // pred_check_branch
    %18 = sbr.rel (0) target = $region9
  $region8: #{transformer_forward.7} parent=0 // pred_region
    _
  $region9: #{transformer_forward.7} parent=0 // pred_fallthru
    _
  // Predicated region
  $region10: #{transformer_forward.7} parent=0 // pred_check
    _
  $region11: #{transformer_forward.7} parent=0 // pred_check_branch
    %20 = sbr.rel (0) target = $region13
  $region12: #{transformer_forward.7} parent=0 // pred_region
    _
  $region13: #{transformer_forward.7} parent=0 // pred_fallthru
    _
  // Predicated region
  $region14: #{transformer_forward.7} parent=0 // pred_check
    _
  $region15: #{transformer_forward.7} parent=0 // pred_check_branch
    %22 = sbr.rel (0) target = $region17
  $region16: #{transformer_forward.7} parent=0 // pred_region
    _
  $region17: #{transformer_forward.7} parent=0 // pred_fallthru
    _
  // Predicated region
  $region18: #{transformer_forward.7} parent=0 // pred_check
    _
  $region19: #{transformer_forward.7} parent=0 // pred_check_branch
    %24 = sbr.rel (0) target = $region21
  $region20: #{transformer_forward.7} parent=0 // pred_region
    _
  $region21: #{transformer_forward.7} parent=0 // pred_fallthru
    _
  // Predicated region
  $region22: #{transformer_forward.7} parent=0 // pred_check
    _
  $region23: #{transformer_forward.7} parent=0 // pred_check_branch
    %26 = sbr.rel (0) target = $region25
  $region24: #{transformer_forward.7} parent=0 // pred_region
    _
  $region25: #{transformer_forward.7} parent=0 // pred_fallthru
    _
  %p28 = scmp.eq.s32.totalorder 0, 0
  // Predicated region
  $region26: #{transformer_forward.7} parent=0 // pred_check
    %p29 = pneg %p28
  $region27: #{transformer_forward.7} parent=0 // pred_check_branch
    %31 = sbr.rel (%p29) target = $region29
  $region28: #{transformer_forward.7} parent=0 // pred_region
    %v32 = vld [vmem:[%s0] sm:$0xff]
    %v33 = vld [vmem:[%s0 + $0x8] sm:$0xff]
    %v34 = vld [vmem:[%s1] sm:$0x1]
    %v35 = vld [vmem:[%s2] sm:$0x1]
    %vm36 = vcmask 261120
    %v37 = vsel %vm36, %v32, 0.0
    %38 = vadd.xlane.f32.xlu0 %v37
    %v39 = vpop.xlane.xlu0 %38
    %v40 = vsel %vm36, %v33, 0.0
    %41 = vadd.xlane.f32.xlu0 %v40
    %v42 = vpop.xlane.xlu0 %41
    %v43 = vrcp.pop 32.0
    %v44 = vmul.f32 32.0, %v43
    %v45 = vsub.f32 1.0, %v44
    %v46 = vmul.f32 %v43, %v45
    %v47 = vadd.f32 %v43, %v46
    %vm48 = vweird.f32 %v43
    %v49 = vsel %vm48, %v43, %v47
    %v50 = vmul.f32 %v39, %v49
    %v51 = vmul.f32 %v42, %v49
    %v52 = vsub.f32 %v32, %v50
    %v53 = vsub.f32 %v33, %v51
    %v54 = vmul.f32 %v52, %v52
    %v55 = vmul.f32 %v53, %v53
    %v56 = vsel %vm36, %v54, 0.0
    %57 = vadd.xlane.f32.xlu0 %v56
    %v58 = vpop.xlane.xlu0 %57
    %v59 = vsel %vm36, %v55, 0.0
    %60 = vadd.xlane.f32.xlu0 %v59
    %v61 = vpop.xlane.xlu0 %60
    %v62 = vmul.f32 %v58, %v49
    %v63 = vmul.f32 %v61, %v49
    %v64 = vadd.f32 %v62, 0.01
    %v65 = vadd.f32 %v63, 0.01
    %v66 = vrsqrt.pop %v64
    %v67 = vmul.f32 %v66, %v64
    %v68 = vmul.f32 %v67, %v66
    %v69 = vmul.f32 0.5, %v68
    %v70 = vsub.f32 1.5, %v69
    %v71 = vmul.f32 %v66, %v70
    %vm72 = vweird.f32 %v64
    %vm73 = vweird.f32 %v66
    %vm74 = vmor %vm72, %vm73
    %v75 = vsel %vm74, %v66, %v71
    %v76 = vrsqrt.pop %v65
    %v77 = vmul.f32 %v76, %v65
    %v78 = vmul.f32 %v77, %v76
    %v79 = vmul.f32 0.5, %v78
    %v80 = vsub.f32 1.5, %v79
    %v81 = vmul.f32 %v76, %v80
    %vm82 = vweird.f32 %v65
    %vm83 = vweird.f32 %v76
    %vm84 = vmor %vm82, %vm83
    %v85 = vsel %vm84, %v76, %v81
    %v86 = vmul.f32 %v52, %v75
    %v87 = vmul.f32 %v53, %v85
    %v89 = vperm.slane %v34, 0
    %v91 = vmul.f32 %v86, %v89
    %v92 = vmul.f32 %v87, %v89
    %v94 = vperm.slane %v35, 0
    %v96 = vadd.f32 %v91, %v94
    %v97 = vadd.f32 %v92, %v94
    %v98 = vpack.c.bf16 %v96, %v96
    %v99 = vpack.c.bf16 %v97, %v97
    %vm100 = vcmask 257024
    %101 = vst.msk [vmem:[%s6] sm:$0xf] %vm100, %v98
    %102 = vst.msk [vmem:[%s6 + $0x4] sm:$0xf] %vm100, %v99
  $region29: #{transformer_forward.7} parent=0 // pred_fallthru
    _
  %v103 = vld [vmem:[%s6] sm:$0xf]
  %v104 = vld [vmem:[%s6 + $0x4] sm:$0xf]
  %v105 = vld [vmem:[%s3] sm:$0xf]
  %v106 = vld [vmem:[%s3 + $0x4] sm:$0xf]
  %v107 = vld [vmem:[%s3 + $0x8] sm:$0xf]
  %v108 = vld [vmem:[%s3 + $0xc] sm:$0xf]
  %v111 = vunpack.c.l.b16 %v103
  %v112 = vunpack.c.l.b16 %v104
  %v113 = vpack.c.b16 %v112, %v111
  %v118 = vunpack.c.l.b16 %v105
  %v119 = vunpack.c.l.b16 %v106
  %v120 = vunpack.c.l.b16 %v107
  %v121 = vunpack.c.l.b16 %v108
  %v122 = vpack.c.b16 %v119, %v118
  %v123 = vpack.c.b16 %v121, %v120
  %vm126 = vcmask 261120
  %v128 = vsel %vm126, %v113, 0
  %130 = vmatpush.bf16.msra.mxu0 0
  %131 = vmatpush.bf16.msra.mxu0 0
  %132 = vmatpush.bf16.msra.mxu0 0
  %133 = vmatpush.bf16.msra.mxu0 0
  %134 = vmatpush.bf16.msra.mxu0 0
  %135 = vmatpush.bf16.msra.mxu0 0
  %136 = vmatpush.bf16.msra.mxu0 %v123
  %137 = vmatpush.bf16.msra.mxu0 %v122
  %138 = vmatmul.bf16.gmra.mxu0 %v128
  %v139 = vpop.f32.mrf.mxu0
  %v140 = vadd.f32 0.0, %v139
  %v141 = vpop.f32.mrf.mxu0
  %v142 = vadd.f32 0.0, %v141
  %143 = vdwg.mxu0
  %v144 = vpack.c.bf16 %v140, %v140
  %v145 = vpack.c.bf16 %v142, %v142
  %vm146 = vcmask 257024
  %147 = vst.msk [vmem:[%s7] sm:$0xf] %vm146, %v144
  %148 = vst.msk [vmem:[%s7 + $0x4] sm:$0xf] %vm146, %v145
  %v149 = vld [vmem:[%s4] sm:$0xf]
  %v150 = vld [vmem:[%s4 + $0x4] sm:$0xf]
  %v151 = vld [vmem:[%s4 + $0x8] sm:$0xf]
  %v152 = vld [vmem:[%s4 + $0xc] sm:$0xf]
  %v157 = vunpack.c.l.b16 %v149
  %v158 = vunpack.c.l.b16 %v150
  %v159 = vunpack.c.l.b16 %v151
  %v160 = vunpack.c.l.b16 %v152
  %v161 = vpack.c.b16 %v158, %v157
  %v162 = vpack.c.b16 %v160, %v159
  %165 = vmatpush.bf16.msra.mxu0 0
  %166 = vmatpush.bf16.msra.mxu0 0
  %167 = vmatpush.bf16.msra.mxu0 0
  %168 = vmatpush.bf16.msra.mxu0 0
  %169 = vmatpush.bf16.msra.mxu0 0
  %170 = vmatpush.bf16.msra.mxu0 0
  %171 = vmatpush.bf16.msra.mxu0 %v162
  %172 = vmatpush.bf16.msra.mxu0 %v161
  %173 = vmatmul.bf16.gmra.mxu0 %v128
  %v174 = vpop.f32.mrf.mxu0
  %v175 = vadd.f32 0.0, %v174
  %v176 = vpop.f32.mrf.mxu0
  %v177 = vadd.f32 0.0, %v176
  %178 = vdwg.mxu0
  %v179 = vpack.c.bf16 %v175, %v175
  %v180 = vpack.c.bf16 %v177, %v177
  %181 = vst.msk [vmem:[%s8] sm:$0xf] %vm146, %v179
  %182 = vst.msk [vmem:[%s8 + $0x4] sm:$0xf] %vm146, %v180
  %v183 = vld [vmem:[%s5] sm:$0xf]
  %v184 = vld [vmem:[%s5 + $0x4] sm:$0xf]
  %v185 = vld [vmem:[%s5 + $0x8] sm:$0xf]
  %v186 = vld [vmem:[%s5 + $0xc] sm:$0xf]
  %v191 = vunpack.c.l.b16 %v183
  %v192 = vunpack.c.l.b16 %v184
  %v193 = vunpack.c.l.b16 %v185
  %v194 = vunpack.c.l.b16 %v186
  %v195 = vpack.c.b16 %v192, %v191
  %v196 = vpack.c.b16 %v194, %v193
  %199 = vmatpush.bf16.msra.mxu0 0
  %200 = vmatpush.bf16.msra.mxu0 0
  %201 = vmatpush.bf16.msra.mxu0 0
  %202 = vmatpush.bf16.msra.mxu0 0
  %203 = vmatpush.bf16.msra.mxu0 0
  %204 = vmatpush.bf16.msra.mxu0 0
  %205 = vmatpush.bf16.msra.mxu0 %v196
  %206 = vmatpush.bf16.msra.mxu0 %v195
  %207 = vmatmul.bf16.gmra.mxu0 %v128
  %v208 = vpop.f32.mrf.mxu0
  %v209 = vadd.f32 0.0, %v208
  %v210 = vpop.f32.mrf.mxu0
  %v211 = vadd.f32 0.0, %v210
  %212 = vdwg.mxu0
  %v213 = vpack.c.bf16 %v209, %v209
  %v214 = vpack.c.bf16 %v211, %v211
  %215 = vst.msk [vmem:[%s9] sm:$0xf] %vm146, %v213
  %216 = vst.msk [vmem:[%s9 + $0x4] sm:$0xf] %vm146, %v214
  // Predicated region
  $region30: #{transformer_forward.7} parent=0 // pred_check
    _
  $region31: #{transformer_forward.7} parent=0 // pred_check_branch
    %218 = sbr.rel (0) target = $region33
  $region32: #{transformer_forward.7} parent=0 // pred_region
    _
  $region33: #{transformer_forward.7} parent=0 // pred_fallthru
    _
  // Predicated region
  $region34: #{transformer_forward.7} parent=0 // pred_check
    _
  $region35: #{transformer_forward.7} parent=0 // pred_check_branch
    %220 = sbr.rel (0) target = $region37
  $region36: #{transformer_forward.7} parent=0 // pred_region
    _
  $region37: #{transformer_forward.7} parent=0 // pred_fallthru
    _
  // Predicated region
  $region38: #{transformer_forward.7} parent=0 // pred_check
    _
  $region39: #{transformer_forward.7} parent=0 // pred_check_branch
    %222 = sbr.rel (0) target = $region41
  $region40: #{transformer_forward.7} parent=0 // pred_region
    _
  $region41: #{transformer_forward.7} parent=0 // pred_fallthru
    _
  // Predicated region
  $region42: #{transformer_forward.7} parent=0 // pred_check
    _
  $region43: #{transformer_forward.7} parent=0 // pred_check_branch
    %224 = sbr.rel (0) target = $region45
  $region44: #{transformer_forward.7} parent=0 // pred_region
    _
  $region45: #{transformer_forward.7} parent=0 // pred_fallthru
    _
  // Predicated region
  $region46: #{transformer_forward.7} parent=0 // pred_check
    _
  $region47: #{transformer_forward.7} parent=0 // pred_check_branch
    %226 = sbr.rel (0) target = $region49
  $region48: #{transformer_forward.7} parent=0 // pred_region
    _
  $region49: #{transformer_forward.7} parent=0 // pred_fallthru
    _
  // Predicated region
  $region50: #{transformer_forward.7} parent=0 // pred_check
    _
  $region51: #{transformer_forward.7} parent=0 // pred_check_branch
    %228 = sbr.rel (0) target = $region53
  $region52: #{transformer_forward.7} parent=0 // pred_region
    _
  $region53: #{transformer_forward.7} parent=0 // pred_fallthru
    _
  // Predicated region
  $region54: #{transformer_forward.7} parent=0 // pred_check
    _
  $region55: #{transformer_forward.7} parent=0 // pred_check_branch
    %230 = sbr.rel (0) target = $region57
  $region56: #{transformer_forward.7} parent=0 // pred_region
    _
  $region57: #{transformer_forward.7} parent=0 // pred_fallthru
    _
  // Predicated region
  $region58: #{transformer_forward.7} parent=0 // pred_check
    _
  $region59: #{transformer_forward.7} parent=0 // pred_check_branch
    %232 = sbr.rel (0) target = $region61
  $region60: #{transformer_forward.7} parent=0 // pred_region
    _
  $region61: #{transformer_forward.7} parent=0 // pred_fallthru
    _

// kernel: transformer_forward.9
$region0: #{transformer_forward.9}
  #allocation0 [shape = 'u32[]', space=smem, size = 0x4, offset = 0x4, fixed_abs, tag = 'smem constant byte address 0x4 - core index']
  #allocation1 [shape = 'u32[72,128]{1,0:T(1,128)}', space=vmem, size = 0x9000, scoped, tag = 'internal scratch']
  #allocation2 [shape = 'bf16[16,32]{1,0:T(8,128)(2,1)}', space=vmem, size = 0x1000, scoped, tag = 'scratch operand']
  %s0 = inlined_call_operand.vmem [shape: bf16[16,32], index: 0, kind: input, shape index: {}]
  %s1 = inlined_call_operand.vmem [shape: bf16[16,32], index: 1, kind: input, shape index: {}]
  %s2 = inlined_call_operand.vmem [shape: f32[1,32], index: 2, kind: input, shape index: {}]
  %s3 = inlined_call_operand.vmem [shape: f32[1,32], index: 3, kind: input, shape index: {}]
  %s4 = inlined_call_operand.vmem [shape: f32[1,32], index: 4, kind: input, shape index: {}]
  %s5 = inlined_call_operand.vmem [shape: bf16[32,64], index: 5, kind: input, shape index: {}]
  %s6 = inlined_call_operand.vmem [shape: f32[1,64], index: 6, kind: input, shape index: {}]
  %s7 = inlined_call_operand.vmem [shape: bf16[64,32], index: 7, kind: input, shape index: {}]
  %s8 = inlined_call_operand.vmem [shape: f32[1,32], index: 8, kind: input, shape index: {}]
  %s9 = inlined_call_operand.vmem [shape: f32[16,32], index: 9, kind: output, shape index: {}]
  %s10 = sld [smem:[#allocation0]]
  $region54: #{transformer_forward.9} parent=0
    _
  %s12 = ssub.s32 1, %s10
  %s13 = scalar_select 0, %s12, %s10
  // Predicated region
  $region2: #{transformer_forward.9} parent=0 // pred_check
    _
  $region3: #{transformer_forward.9} parent=0 // pred_check_branch
    %15 = sbr.rel (0) target = $region5
  $region4: #{transformer_forward.9} parent=0 // pred_region
    _
  $region5: #{transformer_forward.9} parent=0 // pred_fallthru
    _
  // Predicated region
  $region6: #{transformer_forward.9} parent=0 // pred_check
    _
  $region7: #{transformer_forward.9} parent=0 // pred_check_branch
    %17 = sbr.rel (0) target = $region9
  $region8: #{transformer_forward.9} parent=0 // pred_region
    _
  $region9: #{transformer_forward.9} parent=0 // pred_fallthru
    _
  // Predicated region
  $region10: #{transformer_forward.9} parent=0 // pred_check
    _
  $region11: #{transformer_forward.9} parent=0 // pred_check_branch
    %19 = sbr.rel (0) target = $region13
  $region12: #{transformer_forward.9} parent=0 // pred_region
    _
  $region13: #{transformer_forward.9} parent=0 // pred_fallthru
    _
  // Predicated region
  $region14: #{transformer_forward.9} parent=0 // pred_check
    _
  $region15: #{transformer_forward.9} parent=0 // pred_check_branch
    %21 = sbr.rel (0) target = $region17
  $region16: #{transformer_forward.9} parent=0 // pred_region
    _
  $region17: #{transformer_forward.9} parent=0 // pred_fallthru
    _
  // Predicated region
  $region18: #{transformer_forward.9} parent=0 // pred_check
    _
  $region19: #{transformer_forward.9} parent=0 // pred_check_branch
    %23 = sbr.rel (0) target = $region21
  $region20: #{transformer_forward.9} parent=0 // pred_region
    _
  $region21: #{transformer_forward.9} parent=0 // pred_fallthru
    _
  // Predicated region
  $region22: #{transformer_forward.9} parent=0 // pred_check
    _
  $region23: #{transformer_forward.9} parent=0 // pred_check_branch
    %25 = sbr.rel (0) target = $region25
  $region24: #{transformer_forward.9} parent=0 // pred_region
    _
  $region25: #{transformer_forward.9} parent=0 // pred_fallthru
    _
  // Predicated region
  $region26: #{transformer_forward.9} parent=0 // pred_check
    _
  $region27: #{transformer_forward.9} parent=0 // pred_check_branch
    %27 = sbr.rel (0) target = $region29
  $region28: #{transformer_forward.9} parent=0 // pred_region
    _
  $region29: #{transformer_forward.9} parent=0 // pred_fallthru
    _
  // Predicated region
  $region30: #{transformer_forward.9} parent=0 // pred_check
    _
  $region31: #{transformer_forward.9} parent=0 // pred_check_branch
    %29 = sbr.rel (0) target = $region33
  $region32: #{transformer_forward.9} parent=0 // pred_region
    _
  $region33: #{transformer_forward.9} parent=0 // pred_fallthru
    _
  // Predicated region
  $region34: #{transformer_forward.9} parent=0 // pred_check
    _
  $region35: #{transformer_forward.9} parent=0 // pred_check_branch
    %31 = sbr.rel (0) target = $region37
  $region36: #{transformer_forward.9} parent=0 // pred_region
    _
  $region37: #{transformer_forward.9} parent=0 // pred_fallthru
    _
  %p33 = scmp.eq.s32.totalorder 0, 0
  // Predicated region
  $region38: #{transformer_forward.9} parent=0 // pred_check
    %p34 = pneg %p33
  $region39: #{transformer_forward.9} parent=0 // pred_check_branch
    %36 = sbr.rel (%p34) target = $region41
  $region40: #{transformer_forward.9} parent=0 // pred_region
    %v37 = vld [vmem:[%s0] sm:$0xf]
    %v38 = vld [vmem:[%s0 + $0x4] sm:$0xf]
    %v39 = vunpack.c.l.bf16 %v37
    %v40 = vunpack.c.l.bf16 %v38
    %v41 = vld [vmem:[%s1] sm:$0xf]
    %v42 = vld [vmem:[%s1 + $0x4] sm:$0xf]
    %v43 = vunpack.c.l.bf16 %v41
    %v44 = vunpack.c.l.bf16 %v42
    %v45 = vld [vmem:[%s2] sm:$0x1]
    %v47 = vperm.slane %v45, 0
    %v49 = vmul.f32 %v43, %v47
    %v50 = vmul.f32 %v44, %v47
    %v51 = vadd.f32 %v39, %v49
    %v52 = vadd.f32 %v40, %v50
    %v53 = vld [vmem:[%s3] sm:$0x1]
    %v54 = vld [vmem:[%s4] sm:$0x1]
    %vm55 = vcmask 261120
    %v56 = vsel %vm55, %v51, 0.0
    %57 = vadd.xlane.f32.xlu0 %v56
    %v58 = vpop.xlane.xlu0 %57
    %v59 = vsel %vm55, %v52, 0.0
    %60 = vadd.xlane.f32.xlu0 %v59
    %v61 = vpop.xlane.xlu0 %60
    %v62 = vrcp.pop 32.0
    %v63 = vmul.f32 32.0, %v62
    %v64 = vsub.f32 1.0, %v63
    %v65 = vmul.f32 %v62, %v64
    %v66 = vadd.f32 %v62, %v65
    %vm67 = vweird.f32 %v62
    %v68 = vsel %vm67, %v62, %v66
    %v69 = vmul.f32 %v58, %v68
    %v70 = vmul.f32 %v61, %v68
    %v71 = vsub.f32 %v51, %v69
    %v72 = vsub.f32 %v52, %v70
    %v73 = vmul.f32 %v71, %v71
    %v74 = vmul.f32 %v72, %v72
    %v75 = vsel %vm55, %v73, 0.0
    %76 = vadd.xlane.f32.xlu0 %v75
    %v77 = vpop.xlane.xlu0 %76
    %v78 = vsel %vm55, %v74, 0.0
    %79 = vadd.xlane.f32.xlu0 %v78
    %v80 = vpop.xlane.xlu0 %79
    %v81 = vmul.f32 %v77, %v68
    %v82 = vmul.f32 %v80, %v68
    %v83 = vadd.f32 %v81, 0.01
    %v84 = vadd.f32 %v82, 0.01
    %v85 = vrsqrt.pop %v83
    %v86 = vmul.f32 %v85, %v83
    %v87 = vmul.f32 %v86, %v85
    %v88 = vmul.f32 0.5, %v87
    %v89 = vsub.f32 1.5, %v88
    %v90 = vmul.f32 %v85, %v89
    %vm91 = vweird.f32 %v83
    %vm92 = vweird.f32 %v85
    %vm93 = vmor %vm91, %vm92
    %v94 = vsel %vm93, %v85, %v90
    %v95 = vrsqrt.pop %v84
    %v96 = vmul.f32 %v95, %v84
    %v97 = vmul.f32 %v96, %v95
    %v98 = vmul.f32 0.5, %v97
    %v99 = vsub.f32 1.5, %v98
    %v100 = vmul.f32 %v95, %v99
    %vm101 = vweird.f32 %v84
    %vm102 = vweird.f32 %v95
    %vm103 = vmor %vm101, %vm102
    %v104 = vsel %vm103, %v95, %v100
    %v105 = vmul.f32 %v71, %v94
    %v106 = vmul.f32 %v72, %v104
    %v108 = vperm.slane %v53, 0
    %v110 = vmul.f32 %v105, %v108
    %v111 = vmul.f32 %v106, %v108
    %v113 = vperm.slane %v54, 0
    %v115 = vadd.f32 %v110, %v113
    %v116 = vadd.f32 %v111, %v113
    %v117 = vpack.c.bf16 %v115, %v115
    %v118 = vpack.c.bf16 %v116, %v116
    %vm119 = vcmask 257024
    %120 = vst.msk [vmem:[#allocation2] sm:$0xf] %vm119, %v117
    %121 = vst.msk [vmem:[#allocation2 + $0x4] sm:$0xf] %vm119, %v118
    %122 = vst.msk [vmem:[%s9] sm:$0xff] %vm55, %v115
    %123 = vst.msk [vmem:[%s9 + $0x8] sm:$0xff] %vm55, %v116
  $region41: #{transformer_forward.9} parent=0 // pred_fallthru
    _
  %v124 = vld [vmem:[#allocation2] sm:$0xf]
  %v125 = vld [vmem:[#allocation2 + $0x4] sm:$0xf]
  %v126 = vld [vmem:[%s5] sm:$0xf]
  %v127 = vld [vmem:[%s5 + $0x4] sm:$0xf]
  %v128 = vld [vmem:[%s5 + $0x8] sm:$0xf]
  %v129 = vld [vmem:[%s5 + $0xc] sm:$0xf]
  %v130 = vld [vmem:[%s6] sm:$0x1]
  %v132 = vperm.slane %v130, 0
  %v136 = vunpack.c.l.b16 %v124
  %v137 = vunpack.c.l.b16 %v125
  %v138 = vpack.c.b16 %v137, %v136
  %v143 = vunpack.c.l.b16 %v126
  %v144 = vunpack.c.l.b16 %v127
  %v145 = vunpack.c.l.b16 %v128
  %v146 = vunpack.c.l.b16 %v129
  %v147 = vpack.c.b16 %v144, %v143
  %v148 = vpack.c.b16 %v146, %v145
  %vm151 = vcmask 261120
  %v153 = vsel %vm151, %v138, 0
  %155 = vmatpush.bf16.msra.mxu0 0
  %156 = vmatpush.bf16.msra.mxu0 0
  %157 = vmatpush.bf16.msra.mxu0 0
  %158 = vmatpush.bf16.msra.mxu0 0
  %159 = vmatpush.bf16.msra.mxu0 0
  %160 = vmatpush.bf16.msra.mxu0 0
  %161 = vmatpush.bf16.msra.mxu0 %v148
  %162 = vmatpush.bf16.msra.mxu0 %v147
  %163 = vmatmul.bf16.gmra.mxu0 %v153
  %v164 = vpop.f32.mrf.mxu0
  %v165 = vadd.f32 %v132, %v164
  %v166 = vpop.f32.mrf.mxu0
  %v167 = vadd.f32 %v132, %v166
  %168 = vdwg.mxu0
  %v169 = vmax.f32 %v165, 0.0
  %v170 = vmax.f32 %v167, 0.0
  %v171 = vld [vmem:[%s9] sm:$0xff]
  %v172 = vld [vmem:[%s9 + $0x8] sm:$0xff]
  %v173 = vpack.c.bf16 %v170, %v169
  %v174 = vld [vmem:[%s7] sm:$0xf]
  %v175 = vld [vmem:[%s7 + $0x4] sm:$0xf]
  %v176 = vld [vmem:[%s7 + $0x8] sm:$0xf]
  %v177 = vld [vmem:[%s7 + $0xc] sm:$0xf]
  %v178 = vld [vmem:[%s7 + $0x10] sm:$0xf]
  %v179 = vld [vmem:[%s7 + $0x14] sm:$0xf]
  %v180 = vld [vmem:[%s7 + $0x18] sm:$0xf]
  %v181 = vld [vmem:[%s7 + $0x1c] sm:$0xf]
  %v190 = vunpack.c.l.b16 %v174
  %v191 = vunpack.c.l.b16 %v175
  %v192 = vunpack.c.l.b16 %v176
  %v193 = vunpack.c.l.b16 %v177
  %v194 = vunpack.c.l.b16 %v178
  %v195 = vunpack.c.l.b16 %v179
  %v196 = vunpack.c.l.b16 %v180
  %v197 = vunpack.c.l.b16 %v181
  %v198 = vpack.c.b16 %v191, %v190
  %v199 = vpack.c.b16 %v193, %v192
  %v200 = vpack.c.b16 %v195, %v194
  %v201 = vpack.c.b16 %v197, %v196
  %vm206 = vcmask 523264
  %v208 = vsel %vm206, %v173, 0
  %210 = vmatpush.bf16.msra.mxu0 0
  %211 = vmatpush.bf16.msra.mxu0 0
  %212 = vmatpush.bf16.msra.mxu0 0
  %213 = vmatpush.bf16.msra.mxu0 0
  %214 = vmatpush.bf16.msra.mxu0 %v201
  %215 = vmatpush.bf16.msra.mxu0 %v200
  %216 = vmatpush.bf16.msra.mxu0 %v199
  %217 = vmatpush.bf16.msra.mxu0 %v198
  %218 = vmatmul.bf16.gmra.mxu0 %v208
  %v219 = vpop.f32.mrf.mxu0
  %v220 = vadd.f32 0.0, %v219
  %v221 = vpop.f32.mrf.mxu0
  %v222 = vadd.f32 0.0, %v221
  %223 = vdwg.mxu0
  %v224 = vadd.f32 %v171, %v220
  %v225 = vadd.f32 %v172, %v222
  %226 = vst.msk [vmem:[%s9] sm:$0xff] %vm151, %v224
  %227 = vst.msk [vmem:[%s9 + $0x8] sm:$0xff] %vm151, %v225
  // Predicated region
  $region42: #{transformer_forward.9} parent=0 // pred_check
    %p228 = pneg %p33
  $region43: #{transformer_forward.9} parent=0 // pred_check_branch
    %230 = sbr.rel (%p228) target = $region45
  $region44: #{transformer_forward.9} parent=0 // pred_region
    %v231 = vld [vmem:[%s9] sm:$0xff]
    %v232 = vld [vmem:[%s9 + $0x8] sm:$0xff]
    %v233 = vld [vmem:[%s8] sm:$0x1]
    %v235 = vperm.slane %v233, 0
    %v237 = vadd.f32 %v231, %v235
    %v238 = vadd.f32 %v232, %v235
    %239 = vst.msk [vmem:[%s9] sm:$0xff] %vm151, %v237
    %240 = vst.msk [vmem:[%s9 + $0x8] sm:$0xff] %vm151, %v238
  $region45: #{transformer_forward.9} parent=0 // pred_fallthru
    _
  // Predicated region
  $region46: #{transformer_forward.9} parent=0 // pred_check
    _
  $region47: #{transformer_forward.9} parent=0 // pred_check_branch
    %242 = sbr.rel (0) target = $region49
  $region48: #{transformer_forward.9} parent=0 // pred_region
    _
  $region49: #{transformer_forward.9} parent=0 // pred_fallthru
    _
  // Predicated region
  $region50: #{transformer_forward.9} parent=0 // pred_check
    _
  $region51: #{transformer_forward.9} parent=0 // pred_check_branch
    %244 = sbr.rel (0) target = $region53
  $region52: #{transformer_forward.9} parent=0 // pred_region
    _
  $region53: #{transformer_forward.9} parent=0 // pred_fallthru
    _

</llo_original>
